<compile_context>
chip_gen: v7x
topology: tpu7x:2x2x1
jax: 0.10.0
libtpu: 0.0.40
codegen_flags: <defaults>
</compile_context>

<pallas_src>
import functools

import jax
import jax.numpy as jnp
from jax.experimental import pallas as pl
from jax.experimental.pallas import tpu as pltpu

H1 = 1024
H2 = 256


def _round_up(x, m):
    return ((x + m - 1) // m) * m


def _cdiv(a, b):
    return -(-a // b)


def _dta_kernel(d_ref, p_ref, w1_ref, b1_ref, w2_ref, b2_ref,
                w3_ref, b3_ref, out_ref, joint_ref, final_ref):
    """Fused: concat + fc1 + relu + fc2 + relu + final (dropout = identity)."""
    dd = d_ref.shape[1]

    # Fused concat: two contiguous sub-slab stores into the jointemb output
    # tile (avoids a lane-shuffle concatenate and an extra (TB,192) vreg value).
    joint_ref[:, :dd] = d_ref[...]                       # drug first  (TB, 64)
    joint_ref[:, dd:] = p_ref[...]                       # protein     (TB, 128)

    # fc1: single K=192 matmul; bf16 MXU inputs, f32 accumulation.
    xj = joint_ref[...].astype(jnp.bfloat16)             # (TB, 192) bf16 LHS
    h1 = jnp.dot(xj, w1_ref[...], preferred_element_type=jnp.float32)
    # f32 bias + ReLU epilogue (v5e has no bf16 VPU), then bf16 inter-layer
    # storage to halve the (TB,1024) spill/reload traffic between fc1 and fc2.
    h1 = jnp.maximum(h1 + b1_ref[...], 0.0).astype(jnp.bfloat16)

    # fc2
    h2 = jnp.dot(h1, w2_ref[...], preferred_element_type=jnp.float32)
    h2 = jnp.maximum(h2 + b2_ref[...], 0.0)
    final_ref[...] = h2

    # final_dta (N=1): VPU multiply + lane reduce instead of a 1-lane MXU matmul.
    out_ref[...] = (jnp.sum(h2 * w3_ref[...], axis=-1, keepdims=True)
                    + b3_ref[0, 0])


def _choose_tiles(B, block_b):
    """Grid-aware batch tile: >=2 steps when B > 8, padding < 8 rows/step."""
    nsteps = max(1, _cdiv(B, block_b))
    if B > 8 and nsteps < 2:
        nsteps = 2              # give both v7x TensorCores work via "parallel"
    TB = _round_up(_cdiv(B, nsteps), 8)
    Bp = TB * nsteps
    return TB, Bp, nsteps


@functools.partial(jax.jit, static_argnames=("block_b",))
def dta_mlp(d, p, kparams, *, block_b=1024):
    """Run the fused DTA head on (d, p). Returns (out(B,1), jointemb, finalemb)."""
    B, doutdim = d.shape
    poutdim = p.shape[1]
    joint_dim = doutdim + poutdim

    TB, Bp, nsteps = _choose_tiles(B, block_b)
    if Bp != B:
        pad = Bp - B            # bounded to < 8 * nsteps rows
        d = jnp.pad(d, ((0, pad), (0, 0)))
        p = jnp.pad(p, ((0, pad), (0, 0)))

    grid = (nsteps,)

    flops = 2 * Bp * (joint_dim * H1 + H1 * H2 + H2)
    bytes_accessed = (
        joint_dim * H1 * 2 + H1 * H2 * 2            # bf16 weights
        + (H1 + H2 + H2 + 1) * 4                    # f32 biases + w3 row
        + Bp * joint_dim * 4                        # inputs (d, p)
        + Bp * (1 + joint_dim + H2) * 4             # outputs
    )
    cost = pl.CostEstimate(flops=int(flops), transcendentals=0,
                           bytes_accessed=int(bytes_accessed))

    out, jointemb, finalemb = pl.pallas_call(
        _dta_kernel,
        grid=grid,
        in_specs=[
            pl.BlockSpec((TB, doutdim), lambda i: (i, 0)),       # d tile
            pl.BlockSpec((TB, poutdim), lambda i: (i, 0)),       # p tile
            pl.BlockSpec((joint_dim, H1), lambda i: (0, 0)),     # w1 bf16, resident
            pl.BlockSpec((1, H1), lambda i: (0, 0)),             # b1 f32
            pl.BlockSpec((H1, H2), lambda i: (0, 0)),            # w2 bf16, resident
            pl.BlockSpec((1, H2), lambda i: (0, 0)),             # b2 f32
            pl.BlockSpec((1, H2), lambda i: (0, 0)),             # w3 row f32
            pl.BlockSpec(memory_space=pltpu.MemorySpace.SMEM),   # b3 scalar
        ],
        out_specs=(
            pl.BlockSpec((TB, 1), lambda i: (i, 0)),
            pl.BlockSpec((TB, joint_dim), lambda i: (i, 0)),
            pl.BlockSpec((TB, H2), lambda i: (i, 0)),
        ),
        out_shape=(
            jax.ShapeDtypeStruct((Bp, 1), jnp.float32),
            jax.ShapeDtypeStruct((Bp, joint_dim), jnp.float32),
            jax.ShapeDtypeStruct((Bp, H2), jnp.float32),
        ),
        compiler_params=pltpu.CompilerParams(
            dimension_semantics=("parallel",),
            vmem_limit_bytes=48 * 1024 * 1024),      # headroom for TB=1024 tiles
        cost_estimate=cost,
    )(d, p,
      kparams["w1"], kparams["b1"],
      kparams["w2"], kparams["b2"],
      kparams["w3_row"], kparams["b3"])

    if Bp != B:
        out = out[:B]
        jointemb = jointemb[:B]
        finalemb = finalemb[:B]
    return out, jointemb, finalemb


def dta_forward(d, p, kparams):
    """Mirrors DTA.forward(d, p) -> (out.view(-1), jointemb, finalemb, protemb, drugemb)."""
    drugemb = d                    # d_encoder treated as identity
    protemb = p                    # p_encoder treated as identity
    out, jointemb, finalemb = dta_mlp(drugemb, protemb, kparams)
    return out.reshape(-1), jointemb, finalemb, protemb, drugemb


def init_params(key, poutdim=128, doutdim=64):
    """PyTorch-style uniform(+-1/sqrt(fan_in)) init, weights stored (in, out), f32 masters."""
    dims = [(poutdim + doutdim, H1), (H1, H2), (H2, 1)]
    params = {}
    for i, (fan_in, fan_out) in enumerate(dims, start=1):
        key, kw, kb = jax.random.split(key, 3)
        bound = 1.0 / jnp.sqrt(jnp.float32(fan_in))
        params[f"w{i}"] = jax.random.uniform(
            kw, (fan_in, fan_out), jnp.float32, -bound, bound)
        params[f"b{i}"] = jax.random.uniform(
            kb, (1, fan_out), jnp.float32, -bound, bound)
    return params


def prepare_params(params):
    """Kernel-layout params: big weights bf16 (f32 masters kept outside); biases f32.

    NOTE: w1/w2 are quantized to bf16 inside the kernel (f32 accumulation); results
    differ from the f32 PyTorch reference beyond ~1e-3.
    """
    return {
        "w1": params["w1"].astype(jnp.bfloat16),               # (192, 1024)
        "b1": params["b1"],                                    # (1, 1024) f32
        "w2": params["w2"].astype(jnp.bfloat16),               # (1024, 256)
        "b2": params["b2"],                                    # (1, 256) f32
        "w3_row": params["w3"].T,                              # (1, 256) f32 row
        "b3": params["b3"],                                    # (1, 1) f32 (SMEM)
    }


if __name__ == "__main__":
    POUTDIM, DOUTDIM, BATCH = 128, 64, 8

    key = jax.random.PRNGKey(0)
    kd, kp_, kparam = jax.random.split(key, 3)
    d = jax.random.normal(kd, (BATCH, DOUTDIM), jnp.float32)   # drug embedding
    p = jax.random.normal(kp_, (BATCH, POUTDIM), jnp.float32)  # protein embedding
    master = init_params(kparam, POUTDIM, DOUTDIM)
    kparams = prepare_params(master)

    out, jointemb, finalemb, protemb, drugemb = dta_forward(d, p, kparams)
    jax.block_until_ready((out, jointemb, finalemb, protemb, drugemb))

    # Pure-JAX reference mirroring the kernel math (bf16 matmul inputs, f32 acc).
    bf = lambda x: x.astype(jnp.bfloat16).astype(jnp.float32)
    w1f = kparams["w1"].astype(jnp.float32)
    w2f = kparams["w2"].astype(jnp.float32)
    ref_joint = jnp.concatenate([d, p], axis=1)
    ref_h1 = jnp.maximum(bf(ref_joint) @ w1f + kparams["b1"], 0.0)
    ref_h2 = jnp.maximum(bf(ref_h1) @ w2f + kparams["b2"], 0.0)
    ref_out = jnp.sum(ref_h2 * kparams["w3_row"], axis=-1) + kparams["b3"][0, 0]

    assert out.shape == (BATCH,)
    assert jointemb.shape == (BATCH, POUTDIM + DOUTDIM)
    assert finalemb.shape == (BATCH, 256)
    assert jnp.allclose(jointemb, ref_joint)
    assert jnp.allclose(finalemb, ref_h2, atol=2e-3, rtol=2e-3)
    assert jnp.allclose(out, ref_out, atol=2e-3, rtol=2e-3)

    print("KERNEL_OK")
</pallas_src>

<mosaic_0001>
module attributes {stable_mosaic.version = 11 : i64} {
  func.func @_dta_kernel(%arg0: i32, %arg1: memref<8x64xf32, #tpu.memory_space<vmem>>, %arg2: memref<8x128xf32, #tpu.memory_space<vmem>>, %arg3: memref<192x1024xbf16, #tpu.memory_space<vmem>>, %arg4: memref<1x1024xf32, #tpu.memory_space<vmem>>, %arg5: memref<1024x256xbf16, #tpu.memory_space<vmem>>, %arg6: memref<1x256xf32, #tpu.memory_space<vmem>>, %arg7: memref<1x256xf32, #tpu.memory_space<vmem>>, %arg8: memref<1x1xf32, #tpu.memory_space<smem>>, %arg9: memref<8x1xf32, #tpu.memory_space<vmem>>, %arg10: memref<8x192xf32, #tpu.memory_space<vmem>>, %arg11: memref<8x256xf32, #tpu.memory_space<vmem>>) attributes {dimension_semantics = [#tpu.dimension_semantics<parallel>], iteration_bounds = array<i64: 1>, scalar_prefetch = 0 : i64, scratch_operands = 0 : i64, tpu.core_type = #tpu.core_type<tc>, window_params = [{transform_indices = @transform_0, window_bounds = array<i64: 8, 64>}, {transform_indices = @transform_1, window_bounds = array<i64: 8, 128>}, {pipeline_mode = #tpu.pipeline_mode<synchronous>, transform_indices = @transform_2, window_bounds = array<i64: 192, 1024>}, {pipeline_mode = #tpu.pipeline_mode<synchronous>, transform_indices = @transform_3, window_bounds = array<i64: 1, 1024>}, {pipeline_mode = #tpu.pipeline_mode<synchronous>, transform_indices = @transform_4, window_bounds = array<i64: 1024, 256>}, {pipeline_mode = #tpu.pipeline_mode<synchronous>, transform_indices = @transform_5, window_bounds = array<i64: 1, 256>}, {pipeline_mode = #tpu.pipeline_mode<synchronous>, transform_indices = @transform_6, window_bounds = array<i64: 1, 256>}, {transform_indices = @transform_7, window_bounds = array<i64: 1, 1>}, {transform_indices = @transform_8, window_bounds = array<i64: 8, 1>}, {transform_indices = @transform_9, window_bounds = array<i64: 8, 192>}, {transform_indices = @transform_10, window_bounds = array<i64: 8, 256>}]} {
    %c0 = arith.constant 0 : index
    %c0_0 = arith.constant 0 : index
    %0 = vector.load %arg1[%c0, %c0_0] : memref<8x64xf32, #tpu.memory_space<vmem>>, vector<8x64xf32>
    %c0_1 = arith.constant 0 : index
    %c0_2 = arith.constant 0 : index
    %1 = vector.load %arg10[%c0_1, %c0_2] : memref<8x192xf32, #tpu.memory_space<vmem>>, vector<8x64xf32>
    tpu.vector_store %arg10[%c0_1, %c0_2], %0 {strides = array<i32>} : memref<8x192xf32, #tpu.memory_space<vmem>>, vector<8x64xf32>,
    %c0_3 = arith.constant 0 : index
    %c0_4 = arith.constant 0 : index
    %2 = vector.load %arg2[%c0_3, %c0_4] : memref<8x128xf32, #tpu.memory_space<vmem>>, vector<8x128xf32>
    %c0_5 = arith.constant 0 : index
    %c64 = arith.constant 64 : index
    %3 = vector.load %arg10[%c0_5, %c64] : memref<8x192xf32, #tpu.memory_space<vmem>>, vector<8x128xf32>
    tpu.vector_store %arg10[%c0_5, %c64], %2 {strides = array<i32>} : memref<8x192xf32, #tpu.memory_space<vmem>>, vector<8x128xf32>,
    %c0_6 = arith.constant 0 : index
    %c0_7 = arith.constant 0 : index
    %4 = vector.load %arg10[%c0_6, %c0_7] : memref<8x192xf32, #tpu.memory_space<vmem>>, vector<8x192xf32>
    %5 = arith.truncf %4 : vector<8x192xf32> to vector<8x192xbf16>
    %c0_8 = arith.constant 0 : index
    %c0_9 = arith.constant 0 : index
    %6 = vector.load %arg3[%c0_8, %c0_9] : memref<192x1024xbf16, #tpu.memory_space<vmem>>, vector<192x1024xbf16>
    %cst = arith.constant dense<0.000000e+00> : vector<8x1024xf32>
    %7 = tpu.matmul %5, %6, %cst {dimension_numbers = #tpu.dot_dimension_numbers<[1], [0], [0], [1], [0, 0, 1, 1], [], []>} : vector<8x192xbf16>, vector<192x1024xbf16>, vector<8x1024xf32> -> vector<8x1024xf32>
    %c0_10 = arith.constant 0 : index
    %c0_11 = arith.constant 0 : index
    %8 = vector.load %arg4[%c0_10, %c0_11] : memref<1x1024xf32, #tpu.memory_space<vmem>>, vector<1x1024xf32>
    %9 = vector.broadcast %8 : vector<1x1024xf32> to vector<8x1024xf32>
    %10 = arith.addf %7, %9 : vector<8x1024xf32>
    %cst_12 = arith.constant 0.000000e+00 : f32
    %11 = vector.broadcast %cst_12 : f32 to vector<8x1024xf32>
    %12 = arith.maximumf %10, %11 : vector<8x1024xf32>
    %13 = arith.truncf %12 : vector<8x1024xf32> to vector<8x1024xbf16>
    %c0_13 = arith.constant 0 : index
    %c0_14 = arith.constant 0 : index
    %14 = vector.load %arg5[%c0_13, %c0_14] : memref<1024x256xbf16, #tpu.memory_space<vmem>>, vector<1024x256xbf16>
    %cst_15 = arith.constant dense<0.000000e+00> : vector<8x256xf32>
    %15 = tpu.matmul %13, %14, %cst_15 {dimension_numbers = #tpu.dot_dimension_numbers<[1], [0], [0], [1], [0, 0, 1, 1], [], []>} : vector<8x1024xbf16>, vector<1024x256xbf16>, vector<8x256xf32> -> vector<8x256xf32>
    %c0_16 = arith.constant 0 : index
    %c0_17 = arith.constant 0 : index
    %16 = vector.load %arg6[%c0_16, %c0_17] : memref<1x256xf32, #tpu.memory_space<vmem>>, vector<1x256xf32>
    %17 = vector.broadcast %16 : vector<1x256xf32> to vector<8x256xf32>
    %18 = arith.addf %15, %17 : vector<8x256xf32>
    %cst_18 = arith.constant 0.000000e+00 : f32
    %19 = vector.broadcast %cst_18 : f32 to vector<8x256xf32>
    %20 = arith.maximumf %18, %19 : vector<8x256xf32>
    %c0_19 = arith.constant 0 : index
    %c0_20 = arith.constant 0 : index
    %21 = vector.load %arg11[%c0_19, %c0_20] : memref<8x256xf32, #tpu.memory_space<vmem>>, vector<8x256xf32>
    tpu.vector_store %arg11[%c0_19, %c0_20], %20 {strides = array<i32>} : memref<8x256xf32, #tpu.memory_space<vmem>>, vector<8x256xf32>,
    %c0_21 = arith.constant 0 : index
    %c0_22 = arith.constant 0 : index
    %22 = vector.load %arg7[%c0_21, %c0_22] : memref<1x256xf32, #tpu.memory_space<vmem>>, vector<1x256xf32>
    %23 = vector.broadcast %22 : vector<1x256xf32> to vector<8x256xf32>
    %24 = arith.mulf %20, %23 : vector<8x256xf32>
    %cst_23 = arith.constant dense<0.000000e+00> : vector<8xf32>
    %25 = vector.multi_reduction <add>, %24, %cst_23 [1] : vector<8x256xf32> to vector<8xf32>
    %26 = vector.shape_cast %25 : vector<8xf32> to vector<8x1xf32>
    %c0_24 = arith.constant 0 : index
    %c0_25 = arith.constant 0 : index
    %27 = memref.load %arg8[%c0_24, %c0_25] : memref<1x1xf32, #tpu.memory_space<smem>>
    %28 = vector.broadcast %27 : f32 to vector<8x1xf32>
    %29 = arith.addf %26, %28 : vector<8x1xf32>
    %c0_26 = arith.constant 0 : index
    %c0_27 = arith.constant 0 : index
    %30 = vector.load %arg9[%c0_26, %c0_27] : memref<8x1xf32, #tpu.memory_space<vmem>>, vector<8x1xf32>
    tpu.vector_store %arg9[%c0_26, %c0_27], %29 {strides = array<i32>} : memref<8x1xf32, #tpu.memory_space<vmem>>, vector<8x1xf32>,
    return
  }
  func.func @transform_0(%arg0: i32) -> (i32, i32) {
    %c0_i32 = arith.constant 0 : i32
    %c0_i32_0 = arith.constant 0 : i32
    return %arg0, %c0_i32 : i32, i32
  }
  func.func @transform_1(%arg0: i32) -> (i32, i32) {
    %c0_i32 = arith.constant 0 : i32
    %c0_i32_0 = arith.constant 0 : i32
    return %arg0, %c0_i32 : i32, i32
  }
  func.func @transform_2(%arg0: i32) -> (i32, i32) {
    %c0_i32 = arith.constant 0 : i32
    %c0_i32_0 = arith.constant 0 : i32
    %c0_i32_1 = arith.constant 0 : i32
    return %c0_i32, %c0_i32_0 : i32, i32
  }
  func.func @transform_3(%arg0: i32) -> (i32, i32) {
    %c0_i32 = arith.constant 0 : i32
    %c0_i32_0 = arith.constant 0 : i32
    %c0_i32_1 = arith.constant 0 : i32
    return %c0_i32, %c0_i32_0 : i32, i32
  }
  func.func @transform_4(%arg0: i32) -> (i32, i32) {
    %c0_i32 = arith.constant 0 : i32
    %c0_i32_0 = arith.constant 0 : i32
    %c0_i32_1 = arith.constant 0 : i32
    return %c0_i32, %c0_i32_0 : i32, i32
  }
  func.func @transform_5(%arg0: i32) -> (i32, i32) {
    %c0_i32 = arith.constant 0 : i32
    %c0_i32_0 = arith.constant 0 : i32
    %c0_i32_1 = arith.constant 0 : i32
    return %c0_i32, %c0_i32_0 : i32, i32
  }
  func.func @transform_6(%arg0: i32) -> (i32, i32) {
    %c0_i32 = arith.constant 0 : i32
    %c0_i32_0 = arith.constant 0 : i32
    %c0_i32_1 = arith.constant 0 : i32
    return %c0_i32, %c0_i32_0 : i32, i32
  }
  func.func @transform_7(%arg0: i32) -> (i32, i32) {
    %c0_i32 = arith.constant 0 : i32
    %c0_i32_0 = arith.constant 0 : i32
    %c0_i32_1 = arith.constant 0 : i32
    return %c0_i32, %c0_i32_0 : i32, i32
  }
  func.func @transform_8(%arg0: i32) -> (i32, i32) {
    %c0_i32 = arith.constant 0 : i32
    %c0_i32_0 = arith.constant 0 : i32
    return %arg0, %c0_i32 : i32, i32
  }
  func.func @transform_9(%arg0: i32) -> (i32, i32) {
    %c0_i32 = arith.constant 0 : i32
    %c0_i32_0 = arith.constant 0 : i32
    return %arg0, %c0_i32 : i32, i32
  }
  func.func @transform_10(%arg0: i32) -> (i32, i32) {
    %c0_i32 = arith.constant 0 : i32
    %c0_i32_0 = arith.constant 0 : i32
    return %arg0, %c0_i32 : i32, i32
  }
}

</mosaic_0001>

<llo_original>
// kernel: dta_mlp.1
$region0: #{dta_mlp.1}
  #allocation0 [shape = 'u32[]', space=smem, size = 0x4, offset = 0x4, fixed_abs, tag = 'smem constant byte address 0x4 - core index']
  #allocation1 [shape = 'u32[144,128]{1,0:T(1,128)}', space=vmem, size = 0x12000, scoped, tag = 'internal scratch']
  #allocation2 [shape = 'f32[1,1]{1,0:T(1,128)S(6)}', space=smem, size = 0x200, scoped, tag = 'scoped memory for dta_mlp.1']
  %s0 = inlined_call_operand.hbm [shape: f32[8,64], index: 0, kind: input, shape index: {}]
  %s1 = inlined_call_operand.hbm [shape: f32[8,128], index: 1, kind: input, shape index: {}]
  %s2 = inlined_call_operand.hbm [shape: bf16[192,1024], index: 2, kind: input, shape index: {}]
  %s3 = inlined_call_operand.vmem [shape: f32[1,1024], index: 3, kind: input, shape index: {}]
  %s4 = inlined_call_operand.hbm [shape: bf16[1024,256], index: 4, kind: input, shape index: {}]
  %s5 = inlined_call_operand.vmem [shape: f32[1,256], index: 5, kind: input, shape index: {}]
  %s6 = inlined_call_operand.vmem [shape: f32[1,256], index: 6, kind: input, shape index: {}]
  %s7 = inlined_call_operand.<no memory space> [shape: f32[1,1], index: 7, kind: input, shape index: {}]
  %s8 = inlined_call_operand.vmem [shape: f32[8,1], index: 8, kind: output, shape index: {0}]
  %s9 = inlined_call_operand.hbm [shape: f32[8,192], index: 9, kind: output, shape index: {1}]
  %s10 = inlined_call_operand.hbm [shape: f32[8,256], index: 10, kind: output, shape index: {2}]
  %11 = xla_tuple %s8, %s9, %s10
  %s12 = sld [smem:[#allocation0]]
  $region74: #{dta_mlp.1} parent=0
    _
  %s14 = ssub.s32 1, %s12
  %s15 = scalar_select 0, %s14, %s12
  %16 = sst [smem:[#allocation2]] %s7
  $region1: #{dta_mlp.1} parent=0
    #allocation3 [shape = 'u8[4096]{0}', space=vmem, size = 0x1000, scoped, tag = 'input window, operand 0, single buffered']
    #allocation4 [shape = 's32[1]{0}', space=sflag, size = 0x4, scoped, tag = 'scoped memory for dta_mlp.1']
    #allocation5 [shape = 's32[1]{0}', space=sflag, size = 0x4, scoped, tag = 'scoped memory for dta_mlp.1']
    #allocation6 [shape = 'u8[4096]{0}', space=vmem, size = 0x1000, scoped, tag = 'input window, operand 1, single buffered']
    #allocation7 [shape = 's32[1]{0}', space=sflag, size = 0x4, scoped, tag = 'scoped memory for dta_mlp.1']
    #allocation8 [shape = 'u8[393216]{0}', space=vmem, size = 0x60000, scoped, tag = 'input window, operand 2, single buffered']
    #allocation9 [shape = 'u8[524288]{0}', space=vmem, size = 0x80000, scoped, tag = 'input window, operand 4, single buffered']
    #allocation10 [shape = 's32[1]{0}', space=sflag, size = 0x4, scoped, tag = 'scoped memory for dta_mlp.1']
    #allocation11 [shape = 'u8[8192]{0}', space=vmem, size = 0x2000, scoped, tag = 'output window, operand 1, single buffered']
    #allocation12 [shape = 'u8[8192]{0}', space=vmem, size = 0x2000, scoped, tag = 'output window, operand 2, single buffered']
    #allocation13 [shape = 's32[1]{0}', space=sflag, size = 0x4, scoped, tag = 'scoped memory for dta_mlp.1']
    %17 = vsyncpa [#allocation4], 0
    %18 = vsyncpa [#allocation7], 0
    %19 = vsyncpa [#allocation10], 0
    %20 = vsyncpa [#allocation5], 0
    %21 = vsyncpa [#allocation13], 0
    // Predicated region
    $region2: #{dta_mlp.1} parent=1 // pred_check
      _
    $region3: #{dta_mlp.1} parent=1 // pred_check_branch
      %23 = sbr.rel (0) target = $region5
    $region4: #{dta_mlp.1} parent=1 // pred_region
      %s25 = ssub.s32 128, 128
      %26 = vsyncadd [#allocation4], %s25
      %s28 = sshll.u32 [#allocation3], 4
      %s29 = int_to_ptr.vmem [resolvable:$true] %s28
      %31 = dma.hbm_to_vmem [thread:$0]  %s0, 128, %s29, [#allocation4]
    $region5: #{dta_mlp.1} parent=1 // pred_fallthru
      _
    // Predicated region
    $region6: #{dta_mlp.1} parent=1 // pred_check
      _
    $region7: #{dta_mlp.1} parent=1 // pred_check_branch
      %33 = sbr.rel (0) target = $region9
    $region8: #{dta_mlp.1} parent=1 // pred_region
      %s35 = ssub.s32 128, 128
      %36 = vsyncadd [#allocation7], %s35
      %s38 = sshll.u32 [#allocation6], 4
      %s39 = int_to_ptr.vmem [resolvable:$true] %s38
      %41 = dma.hbm_to_vmem [thread:$0]  %s1, 128, %s39, [#allocation7]
    $region9: #{dta_mlp.1} parent=1 // pred_fallthru
      _
    // Predicated region
    $region10: #{dta_mlp.1} parent=1 // pred_check
      _
    $region11: #{dta_mlp.1} parent=1 // pred_check_branch
      %43 = sbr.rel (0) target = $region13
    $region12: #{dta_mlp.1} parent=1 // pred_region
      %s45 = ssub.s32 12288, 12288
      %46 = vsyncadd [#allocation7], %s45
      %s47 = sshll.u32 [#allocation8], 4
      %s48 = int_to_ptr.vmem [resolvable:$true] %s47
      %53 = dma.hbm_to_vmem [thread:$0]  %s2, 12288, %s48, [#allocation7], 512, 512, 32
    $region13: #{dta_mlp.1} parent=1 // pred_fallthru
      _
    // Predicated region
    $region14: #{dta_mlp.1} parent=1 // pred_check
      _
    $region15: #{dta_mlp.1} parent=1 // pred_check_branch
      %55 = sbr.rel (0) target = $region17
    $region16: #{dta_mlp.1} parent=1 // pred_region
      _
    $region17: #{dta_mlp.1} parent=1 // pred_fallthru
      _
    // Predicated region
    $region18: #{dta_mlp.1} parent=1 // pred_check
      _
    $region19: #{dta_mlp.1} parent=1 // pred_check_branch
      %57 = sbr.rel (0) target = $region21
    $region20: #{dta_mlp.1} parent=1 // pred_region
      %s59 = ssub.s32 16384, 16384
      %60 = vsyncadd [#allocation10], %s59
      %s61 = sshll.u32 [#allocation9], 4
      %s62 = int_to_ptr.vmem [resolvable:$true] %s61
      %67 = dma.hbm_to_vmem [thread:$0]  %s4, 16384, %s62, [#allocation10], 128, 128, 8
    $region21: #{dta_mlp.1} parent=1 // pred_fallthru
      _
    // Predicated region
    $region22: #{dta_mlp.1} parent=1 // pred_check
      _
    $region23: #{dta_mlp.1} parent=1 // pred_check_branch
      %69 = sbr.rel (0) target = $region25
    $region24: #{dta_mlp.1} parent=1 // pred_region
      _
    $region25: #{dta_mlp.1} parent=1 // pred_fallthru
      _
    // Predicated region
    $region26: #{dta_mlp.1} parent=1 // pred_check
      _
    $region27: #{dta_mlp.1} parent=1 // pred_check_branch
      %71 = sbr.rel (0) target = $region29
    $region28: #{dta_mlp.1} parent=1 // pred_region
      _
    $region29: #{dta_mlp.1} parent=1 // pred_fallthru
      _
    // Predicated region
    $region30: #{dta_mlp.1} parent=1 // pred_check
      _
    $region31: #{dta_mlp.1} parent=1 // pred_check_branch
      %73 = sbr.rel (0) target = $region33
    $region32: #{dta_mlp.1} parent=1 // pred_region
      _
    $region33: #{dta_mlp.1} parent=1 // pred_fallthru
      _
    // Predicated region
    $region34: #{dta_mlp.1} parent=1 // pred_check
      _
    $region35: #{dta_mlp.1} parent=1 // pred_check_branch
      %75 = sbr.rel (0) target = $region37
    $region36: #{dta_mlp.1} parent=1 // pred_region
      %76 = dma.done [#allocation4], 128
    $region37: #{dta_mlp.1} parent=1 // pred_fallthru
      _
    // Predicated region
    $region38: #{dta_mlp.1} parent=1 // pred_check
      _
    $region39: #{dta_mlp.1} parent=1 // pred_check_branch
      %78 = sbr.rel (0) target = $region41
    $region40: #{dta_mlp.1} parent=1 // pred_region
      %79 = dma.done [#allocation7], 128
    $region41: #{dta_mlp.1} parent=1 // pred_fallthru
      _
    // Predicated region
    $region42: #{dta_mlp.1} parent=1 // pred_check
      _
    $region43: #{dta_mlp.1} parent=1 // pred_check_branch
      %81 = sbr.rel (0) target = $region45
    $region44: #{dta_mlp.1} parent=1 // pred_region
      %82 = dma.done [#allocation7], 12288
    $region45: #{dta_mlp.1} parent=1 // pred_fallthru
      _
    // Predicated region
    $region46: #{dta_mlp.1} parent=1 // pred_check
      _
    $region47: #{dta_mlp.1} parent=1 // pred_check_branch
      %84 = sbr.rel (0) target = $region49
    $region48: #{dta_mlp.1} parent=1 // pred_region
      %85 = dma.done [#allocation10], 16384
    $region49: #{dta_mlp.1} parent=1 // pred_fallthru
      _
    %v87 = vld [vmem:[#allocation3] sm:$0xff]
    %vm88 = vcmask 523264
    %89 = vst.msk [vmem:[#allocation11] sm:$0xff] %vm88, %v87
    %v90 = vld [vmem:[#allocation6] sm:$0xff]
    %92 = vrot.lane.b32.xlu0 %v90, 64
    %v93 = vpop.permute.xlu0 %92
    %vm95 = vcmask 1048064
    %96 = vst.msk [vmem:[#allocation11] sm:$0xff] %vm95, %v93
    %97 = vst.msk [vmem:[#allocation11 + $0x8] sm:$0xff] %vm88, %v93
    %v98 = vld [vmem:[#allocation11] sm:$0xff]
    %v99 = vld [vmem:[#allocation11 + $0x8] sm:$0xff]
    %v100 = vpack.c.bf16 %v98, %v98
    %v101 = vpack.c.bf16 %v99, %v99
    %v102 = vld [vmem:[#allocation8] sm:$0xff]
    %v103 = vld [vmem:[#allocation8 + $0x8] sm:$0xff]
    %v104 = vld [vmem:[#allocation8 + $0x10] sm:$0xff]
    %v105 = vld [vmem:[#allocation8 + $0x18] sm:$0xff]
    %v106 = vld [vmem:[#allocation8 + $0x20] sm:$0xff]
    %v107 = vld [vmem:[#allocation8 + $0x28] sm:$0xff]
    %v108 = vld [vmem:[#allocation8 + $0x30] sm:$0xff]
    %v109 = vld [vmem:[#allocation8 + $0x38] sm:$0xff]
    %v110 = vld [vmem:[#allocation8 + $0x40] sm:$0xff]
    %v111 = vld [vmem:[#allocation8 + $0x48] sm:$0xff]
    %v112 = vld [vmem:[#allocation8 + $0x50] sm:$0xff]
    %v113 = vld [vmem:[#allocation8 + $0x58] sm:$0xff]
    %v114 = vld [vmem:[#allocation8 + $0x60] sm:$0xff]
    %v115 = vld [vmem:[#allocation8 + $0x68] sm:$0xff]
    %v116 = vld [vmem:[#allocation8 + $0x70] sm:$0xff]
    %v117 = vld [vmem:[#allocation8 + $0x78] sm:$0xff]
    %v118 = vld [vmem:[#allocation8 + $0x80] sm:$0xff]
    %v119 = vld [vmem:[#allocation8 + $0x88] sm:$0xff]
    %v120 = vld [vmem:[#allocation8 + $0x90] sm:$0xff]
    %v121 = vld [vmem:[#allocation8 + $0x98] sm:$0xff]
    %v122 = vld [vmem:[#allocation8 + $0xa0] sm:$0xff]
    %v123 = vld [vmem:[#allocation8 + $0xa8] sm:$0xff]
    %v124 = vld [vmem:[#allocation8 + $0xb0] sm:$0xff]
    %v125 = vld [vmem:[#allocation8 + $0xb8] sm:$0xff]
    %v126 = vld [vmem:[#allocation8 + $0xc0] sm:$0xff]
    %v127 = vld [vmem:[#allocation8 + $0xc8] sm:$0xff]
    %v128 = vld [vmem:[#allocation8 + $0xd0] sm:$0xff]
    %v129 = vld [vmem:[#allocation8 + $0xd8] sm:$0xff]
    %v130 = vld [vmem:[#allocation8 + $0xe0] sm:$0xff]
    %v131 = vld [vmem:[#allocation8 + $0xe8] sm:$0xff]
    %v132 = vld [vmem:[#allocation8 + $0xf0] sm:$0xff]
    %v133 = vld [vmem:[#allocation8 + $0xf8] sm:$0xff]
    %v134 = vld [vmem:[#allocation8 + $0x100] sm:$0xff]
    %v135 = vld [vmem:[#allocation8 + $0x108] sm:$0xff]
    %v136 = vld [vmem:[#allocation8 + $0x110] sm:$0xff]
    %v137 = vld [vmem:[#allocation8 + $0x118] sm:$0xff]
    %v138 = vld [vmem:[#allocation8 + $0x120] sm:$0xff]
    %v139 = vld [vmem:[#allocation8 + $0x128] sm:$0xff]
    %v140 = vld [vmem:[#allocation8 + $0x130] sm:$0xff]
    %v141 = vld [vmem:[#allocation8 + $0x138] sm:$0xff]
    %v142 = vld [vmem:[#allocation8 + $0x140] sm:$0xff]
    %v143 = vld [vmem:[#allocation8 + $0x148] sm:$0xff]
    %v144 = vld [vmem:[#allocation8 + $0x150] sm:$0xff]
    %v145 = vld [vmem:[#allocation8 + $0x158] sm:$0xff]
    %v146 = vld [vmem:[#allocation8 + $0x160] sm:$0xff]
    %v147 = vld [vmem:[#allocation8 + $0x168] sm:$0xff]
    %v148 = vld [vmem:[#allocation8 + $0x170] sm:$0xff]
    %v149 = vld [vmem:[#allocation8 + $0x178] sm:$0xff]
    %v150 = vld [vmem:[#allocation8 + $0x180] sm:$0xff]
    %v151 = vld [vmem:[#allocation8 + $0x188] sm:$0xff]
    %v152 = vld [vmem:[#allocation8 + $0x190] sm:$0xff]
    %v153 = vld [vmem:[#allocation8 + $0x198] sm:$0xff]
    %v154 = vld [vmem:[#allocation8 + $0x1a0] sm:$0xff]
    %v155 = vld [vmem:[#allocation8 + $0x1a8] sm:$0xff]
    %v156 = vld [vmem:[#allocation8 + $0x1b0] sm:$0xff]
    %v157 = vld [vmem:[#allocation8 + $0x1b8] sm:$0xff]
    %v158 = vld [vmem:[#allocation8 + $0x1c0] sm:$0xff]
    %v159 = vld [vmem:[#allocation8 + $0x1c8] sm:$0xff]
    %v160 = vld [vmem:[#allocation8 + $0x1d0] sm:$0xff]
    %v161 = vld [vmem:[#allocation8 + $0x1d8] sm:$0xff]
    %v162 = vld [vmem:[#allocation8 + $0x1e0] sm:$0xff]
    %v163 = vld [vmem:[#allocation8 + $0x1e8] sm:$0xff]
    %v164 = vld [vmem:[#allocation8 + $0x1f0] sm:$0xff]
    %v165 = vld [vmem:[#allocation8 + $0x1f8] sm:$0xff]
    %v166 = vld [vmem:[#allocation8 + $0x200] sm:$0xff]
    %v167 = vld [vmem:[#allocation8 + $0x208] sm:$0xff]
    %v168 = vld [vmem:[#allocation8 + $0x210] sm:$0xff]
    %v169 = vld [vmem:[#allocation8 + $0x218] sm:$0xff]
    %v170 = vld [vmem:[#allocation8 + $0x220] sm:$0xff]
    %v171 = vld [vmem:[#allocation8 + $0x228] sm:$0xff]
    %v172 = vld [vmem:[#allocation8 + $0x230] sm:$0xff]
    %v173 = vld [vmem:[#allocation8 + $0x238] sm:$0xff]
    %v174 = vld [vmem:[#allocation8 + $0x240] sm:$0xff]
    %v175 = vld [vmem:[#allocation8 + $0x248] sm:$0xff]
    %v176 = vld [vmem:[#allocation8 + $0x250] sm:$0xff]
    %v177 = vld [vmem:[#allocation8 + $0x258] sm:$0xff]
    %v178 = vld [vmem:[#allocation8 + $0x260] sm:$0xff]
    %v179 = vld [vmem:[#allocation8 + $0x268] sm:$0xff]
    %v180 = vld [vmem:[#allocation8 + $0x270] sm:$0xff]
    %v181 = vld [vmem:[#allocation8 + $0x278] sm:$0xff]
    %v182 = vld [vmem:[#allocation8 + $0x280] sm:$0xff]
    %v183 = vld [vmem:[#allocation8 + $0x288] sm:$0xff]
    %v184 = vld [vmem:[#allocation8 + $0x290] sm:$0xff]
    %v185 = vld [vmem:[#allocation8 + $0x298] sm:$0xff]
    %v186 = vld [vmem:[#allocation8 + $0x2a0] sm:$0xff]
    %v187 = vld [vmem:[#allocation8 + $0x2a8] sm:$0xff]
    %v188 = vld [vmem:[#allocation8 + $0x2b0] sm:$0xff]
    %v189 = vld [vmem:[#allocation8 + $0x2b8] sm:$0xff]
    %v190 = vld [vmem:[#allocation8 + $0x2c0] sm:$0xff]
    %v191 = vld [vmem:[#allocation8 + $0x2c8] sm:$0xff]
    %v192 = vld [vmem:[#allocation8 + $0x2d0] sm:$0xff]
    %v193 = vld [vmem:[#allocation8 + $0x2d8] sm:$0xff]
    %v194 = vld [vmem:[#allocation8 + $0x2e0] sm:$0xff]
    %v195 = vld [vmem:[#allocation8 + $0x2e8] sm:$0xff]
    %v196 = vld [vmem:[#allocation8 + $0x2f0] sm:$0xff]
    %v197 = vld [vmem:[#allocation8 + $0x2f8] sm:$0xff]
    %v198 = vld [vmem:[%s3] sm:$0xff]
    %v200 = vlaneseq
    %v201 = vshrl.u32 %v200, 7
    %v202 = vsub.s32 0, %v201
    %v203 = vrot.slane %v198, %v202
    %v204 = vlaneseq
    %v205 = vshrl.u32 %v204, 7
    %v206 = vsub.s32 1, %v205
    %v207 = vrot.slane %v198, %v206
    %v208 = vlaneseq
    %v209 = vshrl.u32 %v208, 7
    %v210 = vsub.s32 2, %v209
    %v211 = vrot.slane %v198, %v210
    %v212 = vlaneseq
    %v213 = vshrl.u32 %v212, 7
    %v214 = vsub.s32 3, %v213
    %v215 = vrot.slane %v198, %v214
    %v216 = vlaneseq
    %v217 = vshrl.u32 %v216, 7
    %v218 = vsub.s32 4, %v217
    %v219 = vrot.slane %v198, %v218
    %v220 = vlaneseq
    %v221 = vshrl.u32 %v220, 7
    %v222 = vsub.s32 5, %v221
    %v223 = vrot.slane %v198, %v222
    %v224 = vlaneseq
    %v225 = vshrl.u32 %v224, 7
    %v226 = vsub.s32 6, %v225
    %v227 = vrot.slane %v198, %v226
    %v228 = vlaneseq
    %v229 = vshrl.u32 %v228, 7
    %v230 = vsub.s32 7, %v229
    %v231 = vrot.slane %v198, %v230
    %v336 = vunpack.c.l.b16 %v102
    %v337 = vunpack.c.h.b16 %v102
    %v338 = vunpack.c.l.b16 %v103
    %v339 = vunpack.c.h.b16 %v103
    %v340 = vunpack.c.l.b16 %v104
    %v341 = vunpack.c.h.b16 %v104
    %v342 = vunpack.c.l.b16 %v105
    %v343 = vunpack.c.h.b16 %v105
    %v344 = vunpack.c.l.b16 %v106
    %v345 = vunpack.c.h.b16 %v106
    %v346 = vunpack.c.l.b16 %v107
    %v347 = vunpack.c.h.b16 %v107
    %v348 = vunpack.c.l.b16 %v108
    %v349 = vunpack.c.h.b16 %v108
    %v350 = vunpack.c.l.b16 %v109
    %v351 = vunpack.c.h.b16 %v109
    %v352 = vunpack.c.l.b16 %v110
    %v353 = vunpack.c.h.b16 %v110
    %v354 = vunpack.c.l.b16 %v111
    %v355 = vunpack.c.h.b16 %v111
    %v356 = vunpack.c.l.b16 %v112
    %v357 = vunpack.c.h.b16 %v112
    %v358 = vunpack.c.l.b16 %v113
    %v359 = vunpack.c.h.b16 %v113
    %v360 = vunpack.c.l.b16 %v114
    %v361 = vunpack.c.h.b16 %v114
    %v362 = vunpack.c.l.b16 %v115
    %v363 = vunpack.c.h.b16 %v115
    %v364 = vunpack.c.l.b16 %v116
    %v365 = vunpack.c.h.b16 %v116
    %v366 = vunpack.c.l.b16 %v117
    %v367 = vunpack.c.h.b16 %v117
    %v368 = vunpack.c.l.b16 %v118
    %v369 = vunpack.c.h.b16 %v118
    %v370 = vunpack.c.l.b16 %v119
    %v371 = vunpack.c.h.b16 %v119
    %v372 = vunpack.c.l.b16 %v120
    %v373 = vunpack.c.h.b16 %v120
    %v374 = vunpack.c.l.b16 %v121
    %v375 = vunpack.c.h.b16 %v121
    %v376 = vunpack.c.l.b16 %v122
    %v377 = vunpack.c.h.b16 %v122
    %v378 = vunpack.c.l.b16 %v123
    %v379 = vunpack.c.h.b16 %v123
    %v380 = vunpack.c.l.b16 %v124
    %v381 = vunpack.c.h.b16 %v124
    %v382 = vunpack.c.l.b16 %v125
    %v383 = vunpack.c.h.b16 %v125
    %v384 = vunpack.c.l.b16 %v126
    %v385 = vunpack.c.h.b16 %v126
    %v386 = vunpack.c.l.b16 %v127
    %v387 = vunpack.c.h.b16 %v127
    %v388 = vunpack.c.l.b16 %v128
    %v389 = vunpack.c.h.b16 %v128
    %v390 = vunpack.c.l.b16 %v129
    %v391 = vunpack.c.h.b16 %v129
    %v392 = vunpack.c.l.b16 %v130
    %v393 = vunpack.c.h.b16 %v130
    %v394 = vunpack.c.l.b16 %v131
    %v395 = vunpack.c.h.b16 %v131
    %v396 = vunpack.c.l.b16 %v132
    %v397 = vunpack.c.h.b16 %v132
    %v398 = vunpack.c.l.b16 %v133
    %v399 = vunpack.c.h.b16 %v133
    %v400 = vunpack.c.l.b16 %v134
    %v401 = vunpack.c.h.b16 %v134
    %v402 = vunpack.c.l.b16 %v135
    %v403 = vunpack.c.h.b16 %v135
    %v404 = vunpack.c.l.b16 %v136
    %v405 = vunpack.c.h.b16 %v136
    %v406 = vunpack.c.l.b16 %v137
    %v407 = vunpack.c.h.b16 %v137
    %v408 = vunpack.c.l.b16 %v138
    %v409 = vunpack.c.h.b16 %v138
    %v410 = vunpack.c.l.b16 %v139
    %v411 = vunpack.c.h.b16 %v139
    %v412 = vunpack.c.l.b16 %v140
    %v413 = vunpack.c.h.b16 %v140
    %v414 = vunpack.c.l.b16 %v141
    %v415 = vunpack.c.h.b16 %v141
    %v416 = vunpack.c.l.b16 %v142
    %v417 = vunpack.c.h.b16 %v142
    %v418 = vunpack.c.l.b16 %v143
    %v419 = vunpack.c.h.b16 %v143
    %v420 = vunpack.c.l.b16 %v144
    %v421 = vunpack.c.h.b16 %v144
    %v422 = vunpack.c.l.b16 %v145
    %v423 = vunpack.c.h.b16 %v145
    %v424 = vunpack.c.l.b16 %v146
    %v425 = vunpack.c.h.b16 %v146
    %v426 = vunpack.c.l.b16 %v147
    %v427 = vunpack.c.h.b16 %v147
    %v428 = vunpack.c.l.b16 %v148
    %v429 = vunpack.c.h.b16 %v148
    %v430 = vunpack.c.l.b16 %v149
    %v431 = vunpack.c.h.b16 %v149
    %v432 = vunpack.c.l.b16 %v150
    %v433 = vunpack.c.h.b16 %v150
    %v434 = vunpack.c.l.b16 %v151
    %v435 = vunpack.c.h.b16 %v151
    %v436 = vunpack.c.l.b16 %v152
    %v437 = vunpack.c.h.b16 %v152
    %v438 = vunpack.c.l.b16 %v153
    %v439 = vunpack.c.h.b16 %v153
    %v440 = vunpack.c.l.b16 %v154
    %v441 = vunpack.c.h.b16 %v154
    %v442 = vunpack.c.l.b16 %v155
    %v443 = vunpack.c.h.b16 %v155
    %v444 = vunpack.c.l.b16 %v156
    %v445 = vunpack.c.h.b16 %v156
    %v446 = vunpack.c.l.b16 %v157
    %v447 = vunpack.c.h.b16 %v157
    %v448 = vunpack.c.l.b16 %v158
    %v449 = vunpack.c.h.b16 %v158
    %v450 = vunpack.c.l.b16 %v159
    %v451 = vunpack.c.h.b16 %v159
    %v452 = vunpack.c.l.b16 %v160
    %v453 = vunpack.c.h.b16 %v160
    %v454 = vunpack.c.l.b16 %v161
    %v455 = vunpack.c.h.b16 %v161
    %v456 = vunpack.c.l.b16 %v162
    %v457 = vunpack.c.h.b16 %v162
    %v458 = vunpack.c.l.b16 %v163
    %v459 = vunpack.c.h.b16 %v163
    %v460 = vunpack.c.l.b16 %v164
    %v461 = vunpack.c.h.b16 %v164
    %v462 = vunpack.c.l.b16 %v165
    %v463 = vunpack.c.h.b16 %v165
    %v464 = vunpack.c.l.b16 %v166
    %v465 = vunpack.c.h.b16 %v166
    %v466 = vunpack.c.l.b16 %v167
    %v467 = vunpack.c.h.b16 %v167
    %v468 = vunpack.c.l.b16 %v168
    %v469 = vunpack.c.h.b16 %v168
    %v470 = vunpack.c.l.b16 %v169
    %v471 = vunpack.c.h.b16 %v169
    %v472 = vunpack.c.l.b16 %v170
    %v473 = vunpack.c.h.b16 %v170
    %v474 = vunpack.c.l.b16 %v171
    %v475 = vunpack.c.h.b16 %v171
    %v476 = vunpack.c.l.b16 %v172
    %v477 = vunpack.c.h.b16 %v172
    %v478 = vunpack.c.l.b16 %v173
    %v479 = vunpack.c.h.b16 %v173
    %v480 = vunpack.c.l.b16 %v174
    %v481 = vunpack.c.h.b16 %v174
    %v482 = vunpack.c.l.b16 %v175
    %v483 = vunpack.c.h.b16 %v175
    %v484 = vunpack.c.l.b16 %v176
    %v485 = vunpack.c.h.b16 %v176
    %v486 = vunpack.c.l.b16 %v177
    %v487 = vunpack.c.h.b16 %v177
    %v488 = vunpack.c.l.b16 %v178
    %v489 = vunpack.c.h.b16 %v178
    %v490 = vunpack.c.l.b16 %v179
    %v491 = vunpack.c.h.b16 %v179
    %v492 = vunpack.c.l.b16 %v180
    %v493 = vunpack.c.h.b16 %v180
    %v494 = vunpack.c.l.b16 %v181
    %v495 = vunpack.c.h.b16 %v181
    %v496 = vunpack.c.l.b16 %v182
    %v497 = vunpack.c.h.b16 %v182
    %v498 = vunpack.c.l.b16 %v183
    %v499 = vunpack.c.h.b16 %v183
    %v500 = vunpack.c.l.b16 %v184
    %v501 = vunpack.c.h.b16 %v184
    %v502 = vunpack.c.l.b16 %v185
    %v503 = vunpack.c.h.b16 %v185
    %v504 = vunpack.c.l.b16 %v186
    %v505 = vunpack.c.h.b16 %v186
    %v506 = vunpack.c.l.b16 %v187
    %v507 = vunpack.c.h.b16 %v187
    %v508 = vunpack.c.l.b16 %v188
    %v509 = vunpack.c.h.b16 %v188
    %v510 = vunpack.c.l.b16 %v189
    %v511 = vunpack.c.h.b16 %v189
    %v512 = vunpack.c.l.b16 %v190
    %v513 = vunpack.c.h.b16 %v190
    %v514 = vunpack.c.l.b16 %v191
    %v515 = vunpack.c.h.b16 %v191
    %v516 = vunpack.c.l.b16 %v192
    %v517 = vunpack.c.h.b16 %v192
    %v518 = vunpack.c.l.b16 %v193
    %v519 = vunpack.c.h.b16 %v193
    %v520 = vunpack.c.l.b16 %v194
    %v521 = vunpack.c.h.b16 %v194
    %v522 = vunpack.c.l.b16 %v195
    %v523 = vunpack.c.h.b16 %v195
    %v524 = vunpack.c.l.b16 %v196
    %v525 = vunpack.c.h.b16 %v196
    %v526 = vunpack.c.l.b16 %v197
    %v527 = vunpack.c.h.b16 %v197
    %v528 = vpack.c.b16 %v344, %v336
    %v529 = vpack.c.b16 %v345, %v337
    %v530 = vpack.c.b16 %v346, %v338
    %v531 = vpack.c.b16 %v347, %v339
    %v532 = vpack.c.b16 %v348, %v340
    %v533 = vpack.c.b16 %v349, %v341
    %v534 = vpack.c.b16 %v350, %v342
    %v535 = vpack.c.b16 %v351, %v343
    %v536 = vpack.c.b16 %v360, %v352
    %v537 = vpack.c.b16 %v361, %v353
    %v538 = vpack.c.b16 %v362, %v354
    %v539 = vpack.c.b16 %v363, %v355
    %v540 = vpack.c.b16 %v364, %v356
    %v541 = vpack.c.b16 %v365, %v357
    %v542 = vpack.c.b16 %v366, %v358
    %v543 = vpack.c.b16 %v367, %v359
    %v544 = vpack.c.b16 %v376, %v368
    %v545 = vpack.c.b16 %v377, %v369
    %v546 = vpack.c.b16 %v378, %v370
    %v547 = vpack.c.b16 %v379, %v371
    %v548 = vpack.c.b16 %v380, %v372
    %v549 = vpack.c.b16 %v381, %v373
    %v550 = vpack.c.b16 %v382, %v374
    %v551 = vpack.c.b16 %v383, %v375
    %v552 = vpack.c.b16 %v392, %v384
    %v553 = vpack.c.b16 %v393, %v385
    %v554 = vpack.c.b16 %v394, %v386
    %v555 = vpack.c.b16 %v395, %v387
    %v556 = vpack.c.b16 %v396, %v388
    %v557 = vpack.c.b16 %v397, %v389
    %v558 = vpack.c.b16 %v398, %v390
    %v559 = vpack.c.b16 %v399, %v391
    %v560 = vpack.c.b16 %v408, %v400
    %v561 = vpack.c.b16 %v409, %v401
    %v562 = vpack.c.b16 %v410, %v402
    %v563 = vpack.c.b16 %v411, %v403
    %v564 = vpack.c.b16 %v412, %v404
    %v565 = vpack.c.b16 %v413, %v405
    %v566 = vpack.c.b16 %v414, %v406
    %v567 = vpack.c.b16 %v415, %v407
    %v568 = vpack.c.b16 %v424, %v416
    %v569 = vpack.c.b16 %v425, %v417
    %v570 = vpack.c.b16 %v426, %v418
    %v571 = vpack.c.b16 %v427, %v419
    %v572 = vpack.c.b16 %v428, %v420
    %v573 = vpack.c.b16 %v429, %v421
    %v574 = vpack.c.b16 %v430, %v422
    %v575 = vpack.c.b16 %v431, %v423
    %v576 = vpack.c.b16 %v440, %v432
    %v577 = vpack.c.b16 %v441, %v433
    %v578 = vpack.c.b16 %v442, %v434
    %v579 = vpack.c.b16 %v443, %v435
    %v580 = vpack.c.b16 %v444, %v436
    %v581 = vpack.c.b16 %v445, %v437
    %v582 = vpack.c.b16 %v446, %v438
    %v583 = vpack.c.b16 %v447, %v439
    %v584 = vpack.c.b16 %v456, %v448
    %v585 = vpack.c.b16 %v457, %v449
    %v586 = vpack.c.b16 %v458, %v450
    %v587 = vpack.c.b16 %v459, %v451
    %v588 = vpack.c.b16 %v460, %v452
    %v589 = vpack.c.b16 %v461, %v453
    %v590 = vpack.c.b16 %v462, %v454
    %v591 = vpack.c.b16 %v463, %v455
    %v592 = vpack.c.b16 %v472, %v464
    %v593 = vpack.c.b16 %v473, %v465
    %v594 = vpack.c.b16 %v474, %v466
    %v595 = vpack.c.b16 %v475, %v467
    %v596 = vpack.c.b16 %v476, %v468
    %v597 = vpack.c.b16 %v477, %v469
    %v598 = vpack.c.b16 %v478, %v470
    %v599 = vpack.c.b16 %v479, %v471
    %v600 = vpack.c.b16 %v488, %v480
    %v601 = vpack.c.b16 %v489, %v481
    %v602 = vpack.c.b16 %v490, %v482
    %v603 = vpack.c.b16 %v491, %v483
    %v604 = vpack.c.b16 %v492, %v484
    %v605 = vpack.c.b16 %v493, %v485
    %v606 = vpack.c.b16 %v494, %v486
    %v607 = vpack.c.b16 %v495, %v487
    %v608 = vpack.c.b16 %v504, %v496
    %v609 = vpack.c.b16 %v505, %v497
    %v610 = vpack.c.b16 %v506, %v498
    %v611 = vpack.c.b16 %v507, %v499
    %v612 = vpack.c.b16 %v508, %v500
    %v613 = vpack.c.b16 %v509, %v501
    %v614 = vpack.c.b16 %v510, %v502
    %v615 = vpack.c.b16 %v511, %v503
    %v616 = vpack.c.b16 %v520, %v512
    %v617 = vpack.c.b16 %v521, %v513
    %v618 = vpack.c.b16 %v522, %v514
    %v619 = vpack.c.b16 %v523, %v515
    %v620 = vpack.c.b16 %v524, %v516
    %v621 = vpack.c.b16 %v525, %v517
    %v622 = vpack.c.b16 %v526, %v518
    %v623 = vpack.c.b16 %v527, %v519
    %v721 = vsel %vm88, %v101, 0
    %723 = vmatprep.subr.bf16.mxu0 %v529
    %724 = vmatpush1.bf16.msra.mxu0 %v528
    %725 = vmatprep.subr.bf16.mxu0 %v537
    %726 = vmatpush1.bf16.msra.mxu0 %v536
    %727 = vmatprep.subr.bf16.mxu0 %v545
    %728 = vmatpush1.bf16.msra.mxu0 %v544
    %729 = vmatprep.subr.bf16.mxu0 %v553
    %730 = vmatpush1.bf16.msra.mxu0 %v552
    %731 = vmatprep.subr.bf16.mxu0 %v561
    %732 = vmatpush1.bf16.msra.mxu0 %v560
    %733 = vmatprep.subr.bf16.mxu0 %v569
    %734 = vmatpush1.bf16.msra.mxu0 %v568
    %735 = vmatprep.subr.bf16.mxu0 %v577
    %736 = vmatpush1.bf16.msra.mxu0 %v576
    %737 = vmatprep.subr.bf16.mxu0 %v585
    %738 = vmatpush1.bf16.msra.mxu0 %v584
    %739 = vmatprep.subr.bf16.mxu0 %v593
    %740 = vmatpush1.bf16.msra.mxu0 %v592
    %741 = vmatprep.subr.bf16.mxu0 %v601
    %742 = vmatpush1.bf16.msra.mxu0 %v600
    %743 = vmatprep.subr.bf16.mxu0 %v609
    %744 = vmatpush1.bf16.msra.mxu0 %v608
    %745 = vmatprep.subr.bf16.mxu0 %v617
    %746 = vmatpush1.bf16.msra.mxu0 %v616
    %747 = vmatprep.subr.bf16.mxu0 0
    %748 = vmatpush1.bf16.msra.mxu0 0
    %749 = vmatprep.subr.bf16.mxu0 0
    %750 = vmatpush1.bf16.msra.mxu0 0
    %751 = vmatprep.subr.bf16.mxu0 0
    %752 = vmatpush1.bf16.msra.mxu0 0
    %753 = vmatprep.subr.bf16.mxu0 0
    %754 = vmatpush1.bf16.msra.mxu0 0
    %755 = vmatprep.mubr.bf16.mxu0 %v721
    %756 = vmatmul.mubr.bf16.gmra.mrb[0].mxu0 %v100
    %v757 = vpop.f32.mrb[0].mxu0
    %v758 = vadd.f32 %v203, %v757
    %v759 = vpop.f32.mrb[0].mxu0
    %v760 = vadd.f32 %v207, %v759
    %v761 = vpop.f32.mrb[0].mxu0
    %v762 = vpop.f32.mrb[0].mxu0
    %763 = vdwg.mxu0
    %764 = vmatprep.subr.bf16.mxu0 %v531
    %765 = vmatpush1.bf16.msra.mxu0 %v530
    %766 = vmatprep.subr.bf16.mxu0 %v539
    %767 = vmatpush1.bf16.msra.mxu0 %v538
    %768 = vmatprep.subr.bf16.mxu0 %v547
    %769 = vmatpush1.bf16.msra.mxu0 %v546
    %770 = vmatprep.subr.bf16.mxu0 %v555
    %771 = vmatpush1.bf16.msra.mxu0 %v554
    %772 = vmatprep.subr.bf16.mxu0 %v563
    %773 = vmatpush1.bf16.msra.mxu0 %v562
    %774 = vmatprep.subr.bf16.mxu0 %v571
    %775 = vmatpush1.bf16.msra.mxu0 %v570
    %776 = vmatprep.subr.bf16.mxu0 %v579
    %777 = vmatpush1.bf16.msra.mxu0 %v578
    %778 = vmatprep.subr.bf16.mxu0 %v587
    %779 = vmatpush1.bf16.msra.mxu0 %v586
    %780 = vmatprep.subr.bf16.mxu0 %v595
    %781 = vmatpush1.bf16.msra.mxu0 %v594
    %782 = vmatprep.subr.bf16.mxu0 %v603
    %783 = vmatpush1.bf16.msra.mxu0 %v602
    %784 = vmatprep.subr.bf16.mxu0 %v611
    %785 = vmatpush1.bf16.msra.mxu0 %v610
    %786 = vmatprep.subr.bf16.mxu0 %v619
    %787 = vmatpush1.bf16.msra.mxu0 %v618
    %788 = vmatprep.subr.bf16.mxu0 0
    %789 = vmatpush1.bf16.msra.mxu0 0
    %790 = vmatprep.subr.bf16.mxu0 0
    %791 = vmatpush1.bf16.msra.mxu0 0
    %792 = vmatprep.subr.bf16.mxu0 0
    %793 = vmatpush1.bf16.msra.mxu0 0
    %794 = vmatprep.subr.bf16.mxu0 0
    %795 = vmatpush1.bf16.msra.mxu0 0
    %796 = vmatprep.mubr.bf16.mxu0 %v721
    %797 = vmatmul.mubr.bf16.gmra.mrb[0].mxu0 %v100
    %v798 = vpop.f32.mrb[0].mxu0
    %v799 = vadd.f32 %v211, %v798
    %v800 = vpop.f32.mrb[0].mxu0
    %v801 = vadd.f32 %v215, %v800
    %v802 = vpop.f32.mrb[0].mxu0
    %v803 = vpop.f32.mrb[0].mxu0
    %804 = vdwg.mxu0
    %805 = vmatprep.subr.bf16.mxu0 %v533
    %806 = vmatpush1.bf16.msra.mxu0 %v532
    %807 = vmatprep.subr.bf16.mxu0 %v541
    %808 = vmatpush1.bf16.msra.mxu0 %v540
    %809 = vmatprep.subr.bf16.mxu0 %v549
    %810 = vmatpush1.bf16.msra.mxu0 %v548
    %811 = vmatprep.subr.bf16.mxu0 %v557
    %812 = vmatpush1.bf16.msra.mxu0 %v556
    %813 = vmatprep.subr.bf16.mxu0 %v565
    %814 = vmatpush1.bf16.msra.mxu0 %v564
    %815 = vmatprep.subr.bf16.mxu0 %v573
    %816 = vmatpush1.bf16.msra.mxu0 %v572
    %817 = vmatprep.subr.bf16.mxu0 %v581
    %818 = vmatpush1.bf16.msra.mxu0 %v580
    %819 = vmatprep.subr.bf16.mxu0 %v589
    %820 = vmatpush1.bf16.msra.mxu0 %v588
    %821 = vmatprep.subr.bf16.mxu0 %v597
    %822 = vmatpush1.bf16.msra.mxu0 %v596
    %823 = vmatprep.subr.bf16.mxu0 %v605
    %824 = vmatpush1.bf16.msra.mxu0 %v604
    %825 = vmatprep.subr.bf16.mxu0 %v613
    %826 = vmatpush1.bf16.msra.mxu0 %v612
    %827 = vmatprep.subr.bf16.mxu0 %v621
    %828 = vmatpush1.bf16.msra.mxu0 %v620
    %829 = vmatprep.subr.bf16.mxu0 0
    %830 = vmatpush1.bf16.msra.mxu0 0
    %831 = vmatprep.subr.bf16.mxu0 0
    %832 = vmatpush1.bf16.msra.mxu0 0
    %833 = vmatprep.subr.bf16.mxu0 0
    %834 = vmatpush1.bf16.msra.mxu0 0
    %835 = vmatprep.subr.bf16.mxu0 0
    %836 = vmatpush1.bf16.msra.mxu0 0
    %837 = vmatprep.mubr.bf16.mxu0 %v721
    %838 = vmatmul.mubr.bf16.gmra.mrb[0].mxu0 %v100
    %v839 = vpop.f32.mrb[0].mxu0
    %v840 = vadd.f32 %v219, %v839
    %v841 = vpop.f32.mrb[0].mxu0
    %v842 = vadd.f32 %v223, %v841
    %v843 = vpop.f32.mrb[0].mxu0
    %v844 = vpop.f32.mrb[0].mxu0
    %845 = vdwg.mxu0
    %846 = vmatprep.subr.bf16.mxu0 %v535
    %847 = vmatpush1.bf16.msra.mxu0 %v534
    %848 = vmatprep.subr.bf16.mxu0 %v543
    %849 = vmatpush1.bf16.msra.mxu0 %v542
    %850 = vmatprep.subr.bf16.mxu0 %v551
    %851 = vmatpush1.bf16.msra.mxu0 %v550
    %852 = vmatprep.subr.bf16.mxu0 %v559
    %853 = vmatpush1.bf16.msra.mxu0 %v558
    %854 = vmatprep.subr.bf16.mxu0 %v567
    %855 = vmatpush1.bf16.msra.mxu0 %v566
    %856 = vmatprep.subr.bf16.mxu0 %v575
    %857 = vmatpush1.bf16.msra.mxu0 %v574
    %858 = vmatprep.subr.bf16.mxu0 %v583
    %859 = vmatpush1.bf16.msra.mxu0 %v582
    %860 = vmatprep.subr.bf16.mxu0 %v591
    %861 = vmatpush1.bf16.msra.mxu0 %v590
    %862 = vmatprep.subr.bf16.mxu0 %v599
    %863 = vmatpush1.bf16.msra.mxu0 %v598
    %864 = vmatprep.subr.bf16.mxu0 %v607
    %865 = vmatpush1.bf16.msra.mxu0 %v606
    %866 = vmatprep.subr.bf16.mxu0 %v615
    %867 = vmatpush1.bf16.msra.mxu0 %v614
    %868 = vmatprep.subr.bf16.mxu0 %v623
    %869 = vmatpush1.bf16.msra.mxu0 %v622
    %870 = vmatprep.subr.bf16.mxu0 0
    %871 = vmatpush1.bf16.msra.mxu0 0
    %872 = vmatprep.subr.bf16.mxu0 0
    %873 = vmatpush1.bf16.msra.mxu0 0
    %874 = vmatprep.subr.bf16.mxu0 0
    %875 = vmatpush1.bf16.msra.mxu0 0
    %876 = vmatprep.subr.bf16.mxu0 0
    %877 = vmatpush1.bf16.msra.mxu0 0
    %878 = vmatprep.mubr.bf16.mxu0 %v721
    %879 = vmatmul.mubr.bf16.gmra.mrb[0].mxu0 %v100
    %v880 = vpop.f32.mrb[0].mxu0
    %v881 = vadd.f32 %v227, %v880
    %v882 = vpop.f32.mrb[0].mxu0
    %v883 = vadd.f32 %v231, %v882
    %v884 = vpop.f32.mrb[0].mxu0
    %v885 = vpop.f32.mrb[0].mxu0
    %886 = vdwg.mxu0
    %v887 = vmax.f32 %v758, 0.0
    %v888 = vmax.f32 %v760, 0.0
    %v889 = vmax.f32 %v799, 0.0
    %v890 = vmax.f32 %v801, 0.0
    %v891 = vmax.f32 %v840, 0.0
    %v892 = vmax.f32 %v842, 0.0
    %v893 = vmax.f32 %v881, 0.0
    %v894 = vmax.f32 %v883, 0.0
    %v895 = vpack.c.bf16 %v887, %v887
    %v896 = vpack.c.bf16 %v888, %v888
    %v897 = vpack.c.bf16 %v889, %v889
    %v898 = vpack.c.bf16 %v890, %v890
    %v899 = vpack.c.bf16 %v891, %v891
    %v900 = vpack.c.bf16 %v892, %v892
    %v901 = vpack.c.bf16 %v893, %v893
    %v902 = vpack.c.bf16 %v894, %v894
    %v903 = vld [vmem:[#allocation9] sm:$0xff]
    %v904 = vld [vmem:[#allocation9 + $0x8] sm:$0xff]
    %v905 = vld [vmem:[#allocation9 + $0x10] sm:$0xff]
    %v906 = vld [vmem:[#allocation9 + $0x18] sm:$0xff]
    %v907 = vld [vmem:[#allocation9 + $0x20] sm:$0xff]
    %v908 = vld [vmem:[#allocation9 + $0x28] sm:$0xff]
    %v909 = vld [vmem:[#allocation9 + $0x30] sm:$0xff]
    %v910 = vld [vmem:[#allocation9 + $0x38] sm:$0xff]
    %v911 = vld [vmem:[#allocation9 + $0x40] sm:$0xff]
    %v912 = vld [vmem:[#allocation9 + $0x48] sm:$0xff]
    %v913 = vld [vmem:[#allocation9 + $0x50] sm:$0xff]
    %v914 = vld [vmem:[#allocation9 + $0x58] sm:$0xff]
    %v915 = vld [vmem:[#allocation9 + $0x60] sm:$0xff]
    %v916 = vld [vmem:[#allocation9 + $0x68] sm:$0xff]
    %v917 = vld [vmem:[#allocation9 + $0x70] sm:$0xff]
    %v918 = vld [vmem:[#allocation9 + $0x78] sm:$0xff]
    %v919 = vld [vmem:[#allocation9 + $0x80] sm:$0xff]
    %v920 = vld [vmem:[#allocation9 + $0x88] sm:$0xff]
    %v921 = vld [vmem:[#allocation9 + $0x90] sm:$0xff]
    %v922 = vld [vmem:[#allocation9 + $0x98] sm:$0xff]
    %v923 = vld [vmem:[#allocation9 + $0xa0] sm:$0xff]
    %v924 = vld [vmem:[#allocation9 + $0xa8] sm:$0xff]
    %v925 = vld [vmem:[#allocation9 + $0xb0] sm:$0xff]
    %v926 = vld [vmem:[#allocation9 + $0xb8] sm:$0xff]
    %v927 = vld [vmem:[#allocation9 + $0xc0] sm:$0xff]
    %v928 = vld [vmem:[#allocation9 + $0xc8] sm:$0xff]
    %v929 = vld [vmem:[#allocation9 + $0xd0] sm:$0xff]
    %v930 = vld [vmem:[#allocation9 + $0xd8] sm:$0xff]
    %v931 = vld [vmem:[#allocation9 + $0xe0] sm:$0xff]
    %v932 = vld [vmem:[#allocation9 + $0xe8] sm:$0xff]
    %v933 = vld [vmem:[#allocation9 + $0xf0] sm:$0xff]
    %v934 = vld [vmem:[#allocation9 + $0xf8] sm:$0xff]
    %v935 = vld [vmem:[#allocation9 + $0x100] sm:$0xff]
    %v936 = vld [vmem:[#allocation9 + $0x108] sm:$0xff]
    %v937 = vld [vmem:[#allocation9 + $0x110] sm:$0xff]
    %v938 = vld [vmem:[#allocation9 + $0x118] sm:$0xff]
    %v939 = vld [vmem:[#allocation9 + $0x120] sm:$0xff]
    %v940 = vld [vmem:[#allocation9 + $0x128] sm:$0xff]
    %v941 = vld [vmem:[#allocation9 + $0x130] sm:$0xff]
    %v942 = vld [vmem:[#allocation9 + $0x138] sm:$0xff]
    %v943 = vld [vmem:[#allocation9 + $0x140] sm:$0xff]
    %v944 = vld [vmem:[#allocation9 + $0x148] sm:$0xff]
    %v945 = vld [vmem:[#allocation9 + $0x150] sm:$0xff]
    %v946 = vld [vmem:[#allocation9 + $0x158] sm:$0xff]
    %v947 = vld [vmem:[#allocation9 + $0x160] sm:$0xff]
    %v948 = vld [vmem:[#allocation9 + $0x168] sm:$0xff]
    %v949 = vld [vmem:[#allocation9 + $0x170] sm:$0xff]
    %v950 = vld [vmem:[#allocation9 + $0x178] sm:$0xff]
    %v951 = vld [vmem:[#allocation9 + $0x180] sm:$0xff]
    %v952 = vld [vmem:[#allocation9 + $0x188] sm:$0xff]
    %v953 = vld [vmem:[#allocation9 + $0x190] sm:$0xff]
    %v954 = vld [vmem:[#allocation9 + $0x198] sm:$0xff]
    %v955 = vld [vmem:[#allocation9 + $0x1a0] sm:$0xff]
    %v956 = vld [vmem:[#allocation9 + $0x1a8] sm:$0xff]
    %v957 = vld [vmem:[#allocation9 + $0x1b0] sm:$0xff]
    %v958 = vld [vmem:[#allocation9 + $0x1b8] sm:$0xff]
    %v959 = vld [vmem:[#allocation9 + $0x1c0] sm:$0xff]
    %v960 = vld [vmem:[#allocation9 + $0x1c8] sm:$0xff]
    %v961 = vld [vmem:[#allocation9 + $0x1d0] sm:$0xff]
    %v962 = vld [vmem:[#allocation9 + $0x1d8] sm:$0xff]
    %v963 = vld [vmem:[#allocation9 + $0x1e0] sm:$0xff]
    %v964 = vld [vmem:[#allocation9 + $0x1e8] sm:$0xff]
    %v965 = vld [vmem:[#allocation9 + $0x1f0] sm:$0xff]
    %v966 = vld [vmem:[#allocation9 + $0x1f8] sm:$0xff]
    %v967 = vld [vmem:[#allocation9 + $0x200] sm:$0xff]
    %v968 = vld [vmem:[#allocation9 + $0x208] sm:$0xff]
    %v969 = vld [vmem:[#allocation9 + $0x210] sm:$0xff]
    %v970 = vld [vmem:[#allocation9 + $0x218] sm:$0xff]
    %v971 = vld [vmem:[#allocation9 + $0x220] sm:$0xff]
    %v972 = vld [vmem:[#allocation9 + $0x228] sm:$0xff]
    %v973 = vld [vmem:[#allocation9 + $0x230] sm:$0xff]
    %v974 = vld [vmem:[#allocation9 + $0x238] sm:$0xff]
    %v975 = vld [vmem:[#allocation9 + $0x240] sm:$0xff]
    %v976 = vld [vmem:[#allocation9 + $0x248] sm:$0xff]
    %v977 = vld [vmem:[#allocation9 + $0x250] sm:$0xff]
    %v978 = vld [vmem:[#allocation9 + $0x258] sm:$0xff]
    %v979 = vld [vmem:[#allocation9 + $0x260] sm:$0xff]
    %v980 = vld [vmem:[#allocation9 + $0x268] sm:$0xff]
    %v981 = vld [vmem:[#allocation9 + $0x270] sm:$0xff]
    %v982 = vld [vmem:[#allocation9 + $0x278] sm:$0xff]
    %v983 = vld [vmem:[#allocation9 + $0x280] sm:$0xff]
    %v984 = vld [vmem:[#allocation9 + $0x288] sm:$0xff]
    %v985 = vld [vmem:[#allocation9 + $0x290] sm:$0xff]
    %v986 = vld [vmem:[#allocation9 + $0x298] sm:$0xff]
    %v987 = vld [vmem:[#allocation9 + $0x2a0] sm:$0xff]
    %v988 = vld [vmem:[#allocation9 + $0x2a8] sm:$0xff]
    %v989 = vld [vmem:[#allocation9 + $0x2b0] sm:$0xff]
    %v990 = vld [vmem:[#allocation9 + $0x2b8] sm:$0xff]
    %v991 = vld [vmem:[#allocation9 + $0x2c0] sm:$0xff]
    %v992 = vld [vmem:[#allocation9 + $0x2c8] sm:$0xff]
    %v993 = vld [vmem:[#allocation9 + $0x2d0] sm:$0xff]
    %v994 = vld [vmem:[#allocation9 + $0x2d8] sm:$0xff]
    %v995 = vld [vmem:[#allocation9 + $0x2e0] sm:$0xff]
    %v996 = vld [vmem:[#allocation9 + $0x2e8] sm:$0xff]
    %v997 = vld [vmem:[#allocation9 + $0x2f0] sm:$0xff]
    %v998 = vld [vmem:[#allocation9 + $0x2f8] sm:$0xff]
    %v999 = vld [vmem:[#allocation9 + $0x300] sm:$0xff]
    %v1000 = vld [vmem:[#allocation9 + $0x308] sm:$0xff]
    %v1001 = vld [vmem:[#allocation9 + $0x310] sm:$0xff]
    %v1002 = vld [vmem:[#allocation9 + $0x318] sm:$0xff]
    %v1003 = vld [vmem:[#allocation9 + $0x320] sm:$0xff]
    %v1004 = vld [vmem:[#allocation9 + $0x328] sm:$0xff]
    %v1005 = vld [vmem:[#allocation9 + $0x330] sm:$0xff]
    %v1006 = vld [vmem:[#allocation9 + $0x338] sm:$0xff]
    %v1007 = vld [vmem:[#allocation9 + $0x340] sm:$0xff]
    %v1008 = vld [vmem:[#allocation9 + $0x348] sm:$0xff]
    %v1009 = vld [vmem:[#allocation9 + $0x350] sm:$0xff]
    %v1010 = vld [vmem:[#allocation9 + $0x358] sm:$0xff]
    %v1011 = vld [vmem:[#allocation9 + $0x360] sm:$0xff]
    %v1012 = vld [vmem:[#allocation9 + $0x368] sm:$0xff]
    %v1013 = vld [vmem:[#allocation9 + $0x370] sm:$0xff]
    %v1014 = vld [vmem:[#allocation9 + $0x378] sm:$0xff]
    %v1015 = vld [vmem:[#allocation9 + $0x380] sm:$0xff]
    %v1016 = vld [vmem:[#allocation9 + $0x388] sm:$0xff]
    %v1017 = vld [vmem:[#allocation9 + $0x390] sm:$0xff]
    %v1018 = vld [vmem:[#allocation9 + $0x398] sm:$0xff]
    %v1019 = vld [vmem:[#allocation9 + $0x3a0] sm:$0xff]
    %v1020 = vld [vmem:[#allocation9 + $0x3a8] sm:$0xff]
    %v1021 = vld [vmem:[#allocation9 + $0x3b0] sm:$0xff]
    %v1022 = vld [vmem:[#allocation9 + $0x3b8] sm:$0xff]
    %v1023 = vld [vmem:[#allocation9 + $0x3c0] sm:$0xff]
    %v1024 = vld [vmem:[#allocation9 + $0x3c8] sm:$0xff]
    %v1025 = vld [vmem:[#allocation9 + $0x3d0] sm:$0xff]
    %v1026 = vld [vmem:[#allocation9 + $0x3d8] sm:$0xff]
    %v1027 = vld [vmem:[#allocation9 + $0x3e0] sm:$0xff]
    %v1028 = vld [vmem:[#allocation9 + $0x3e8] sm:$0xff]
    %v1029 = vld [vmem:[#allocation9 + $0x3f0] sm:$0xff]
    %v1030 = vld [vmem:[#allocation9 + $0x3f8] sm:$0xff]
    %v1031 = vld [vmem:[%s5] sm:$0x3]
    %v1033 = vlaneseq
    %v1034 = vshrl.u32 %v1033, 7
    %v1035 = vsub.s32 0, %v1034
    %v1036 = vrot.slane %v1031, %v1035
    %v1037 = vlaneseq
    %v1038 = vshrl.u32 %v1037, 7
    %v1039 = vsub.s32 1, %v1038
    %v1040 = vrot.slane %v1031, %v1039
    %v1171 = vunpack.c.l.b16 %v903
    %v1172 = vunpack.c.h.b16 %v903
    %v1173 = vunpack.c.l.b16 %v904
    %v1174 = vunpack.c.h.b16 %v904
    %v1175 = vunpack.c.l.b16 %v905
    %v1176 = vunpack.c.h.b16 %v905
    %v1177 = vunpack.c.l.b16 %v906
    %v1178 = vunpack.c.h.b16 %v906
    %v1179 = vunpack.c.l.b16 %v907
    %v1180 = vunpack.c.h.b16 %v907
    %v1181 = vunpack.c.l.b16 %v908
    %v1182 = vunpack.c.h.b16 %v908
    %v1183 = vunpack.c.l.b16 %v909
    %v1184 = vunpack.c.h.b16 %v909
    %v1185 = vunpack.c.l.b16 %v910
    %v1186 = vunpack.c.h.b16 %v910
    %v1187 = vunpack.c.l.b16 %v911
    %v1188 = vunpack.c.h.b16 %v911
    %v1189 = vunpack.c.l.b16 %v912
    %v1190 = vunpack.c.h.b16 %v912
    %v1191 = vunpack.c.l.b16 %v913
    %v1192 = vunpack.c.h.b16 %v913
    %v1193 = vunpack.c.l.b16 %v914
    %v1194 = vunpack.c.h.b16 %v914
    %v1195 = vunpack.c.l.b16 %v915
    %v1196 = vunpack.c.h.b16 %v915
    %v1197 = vunpack.c.l.b16 %v916
    %v1198 = vunpack.c.h.b16 %v916
    %v1199 = vunpack.c.l.b16 %v917
    %v1200 = vunpack.c.h.b16 %v917
    %v1201 = vunpack.c.l.b16 %v918
    %v1202 = vunpack.c.h.b16 %v918
    %v1203 = vunpack.c.l.b16 %v919
    %v1204 = vunpack.c.h.b16 %v919
    %v1205 = vunpack.c.l.b16 %v920
    %v1206 = vunpack.c.h.b16 %v920
    %v1207 = vunpack.c.l.b16 %v921
    %v1208 = vunpack.c.h.b16 %v921
    %v1209 = vunpack.c.l.b16 %v922
    %v1210 = vunpack.c.h.b16 %v922
    %v1211 = vunpack.c.l.b16 %v923
    %v1212 = vunpack.c.h.b16 %v923
    %v1213 = vunpack.c.l.b16 %v924
    %v1214 = vunpack.c.h.b16 %v924
    %v1215 = vunpack.c.l.b16 %v925
    %v1216 = vunpack.c.h.b16 %v925
    %v1217 = vunpack.c.l.b16 %v926
    %v1218 = vunpack.c.h.b16 %v926
    %v1219 = vunpack.c.l.b16 %v927
    %v1220 = vunpack.c.h.b16 %v927
    %v1221 = vunpack.c.l.b16 %v928
    %v1222 = vunpack.c.h.b16 %v928
    %v1223 = vunpack.c.l.b16 %v929
    %v1224 = vunpack.c.h.b16 %v929
    %v1225 = vunpack.c.l.b16 %v930
    %v1226 = vunpack.c.h.b16 %v930
    %v1227 = vunpack.c.l.b16 %v931
    %v1228 = vunpack.c.h.b16 %v931
    %v1229 = vunpack.c.l.b16 %v932
    %v1230 = vunpack.c.h.b16 %v932
    %v1231 = vunpack.c.l.b16 %v933
    %v1232 = vunpack.c.h.b16 %v933
    %v1233 = vunpack.c.l.b16 %v934
    %v1234 = vunpack.c.h.b16 %v934
    %v1235 = vunpack.c.l.b16 %v935
    %v1236 = vunpack.c.h.b16 %v935
    %v1237 = vunpack.c.l.b16 %v936
    %v1238 = vunpack.c.h.b16 %v936
    %v1239 = vunpack.c.l.b16 %v937
    %v1240 = vunpack.c.h.b16 %v937
    %v1241 = vunpack.c.l.b16 %v938
    %v1242 = vunpack.c.h.b16 %v938
    %v1243 = vunpack.c.l.b16 %v939
    %v1244 = vunpack.c.h.b16 %v939
    %v1245 = vunpack.c.l.b16 %v940
    %v1246 = vunpack.c.h.b16 %v940
    %v1247 = vunpack.c.l.b16 %v941
    %v1248 = vunpack.c.h.b16 %v941
    %v1249 = vunpack.c.l.b16 %v942
    %v1250 = vunpack.c.h.b16 %v942
    %v1251 = vunpack.c.l.b16 %v943
    %v1252 = vunpack.c.h.b16 %v943
    %v1253 = vunpack.c.l.b16 %v944
    %v1254 = vunpack.c.h.b16 %v944
    %v1255 = vunpack.c.l.b16 %v945
    %v1256 = vunpack.c.h.b16 %v945
    %v1257 = vunpack.c.l.b16 %v946
    %v1258 = vunpack.c.h.b16 %v946
    %v1259 = vunpack.c.l.b16 %v947
    %v1260 = vunpack.c.h.b16 %v947
    %v1261 = vunpack.c.l.b16 %v948
    %v1262 = vunpack.c.h.b16 %v948
    %v1263 = vunpack.c.l.b16 %v949
    %v1264 = vunpack.c.h.b16 %v949
    %v1265 = vunpack.c.l.b16 %v950
    %v1266 = vunpack.c.h.b16 %v950
    %v1267 = vunpack.c.l.b16 %v951
    %v1268 = vunpack.c.h.b16 %v951
    %v1269 = vunpack.c.l.b16 %v952
    %v1270 = vunpack.c.h.b16 %v952
    %v1271 = vunpack.c.l.b16 %v953
    %v1272 = vunpack.c.h.b16 %v953
    %v1273 = vunpack.c.l.b16 %v954
    %v1274 = vunpack.c.h.b16 %v954
    %v1275 = vunpack.c.l.b16 %v955
    %v1276 = vunpack.c.h.b16 %v955
    %v1277 = vunpack.c.l.b16 %v956
    %v1278 = vunpack.c.h.b16 %v956
    %v1279 = vunpack.c.l.b16 %v957
    %v1280 = vunpack.c.h.b16 %v957
    %v1281 = vunpack.c.l.b16 %v958
    %v1282 = vunpack.c.h.b16 %v958
    %v1283 = vunpack.c.l.b16 %v959
    %v1284 = vunpack.c.h.b16 %v959
    %v1285 = vunpack.c.l.b16 %v960
    %v1286 = vunpack.c.h.b16 %v960
    %v1287 = vunpack.c.l.b16 %v961
    %v1288 = vunpack.c.h.b16 %v961
    %v1289 = vunpack.c.l.b16 %v962
    %v1290 = vunpack.c.h.b16 %v962
    %v1291 = vunpack.c.l.b16 %v963
    %v1292 = vunpack.c.h.b16 %v963
    %v1293 = vunpack.c.l.b16 %v964
    %v1294 = vunpack.c.h.b16 %v964
    %v1295 = vunpack.c.l.b16 %v965
    %v1296 = vunpack.c.h.b16 %v965
    %v1297 = vunpack.c.l.b16 %v966
    %v1298 = vunpack.c.h.b16 %v966
    %v1299 = vunpack.c.l.b16 %v967
    %v1300 = vunpack.c.h.b16 %v967
    %v1301 = vunpack.c.l.b16 %v968
    %v1302 = vunpack.c.h.b16 %v968
    %v1303 = vunpack.c.l.b16 %v969
    %v1304 = vunpack.c.h.b16 %v969
    %v1305 = vunpack.c.l.b16 %v970
    %v1306 = vunpack.c.h.b16 %v970
    %v1307 = vunpack.c.l.b16 %v971
    %v1308 = vunpack.c.h.b16 %v971
    %v1309 = vunpack.c.l.b16 %v972
    %v1310 = vunpack.c.h.b16 %v972
    %v1311 = vunpack.c.l.b16 %v973
    %v1312 = vunpack.c.h.b16 %v973
    %v1313 = vunpack.c.l.b16 %v974
    %v1314 = vunpack.c.h.b16 %v974
    %v1315 = vunpack.c.l.b16 %v975
    %v1316 = vunpack.c.h.b16 %v975
    %v1317 = vunpack.c.l.b16 %v976
    %v1318 = vunpack.c.h.b16 %v976
    %v1319 = vunpack.c.l.b16 %v977
    %v1320 = vunpack.c.h.b16 %v977
    %v1321 = vunpack.c.l.b16 %v978
    %v1322 = vunpack.c.h.b16 %v978
    %v1323 = vunpack.c.l.b16 %v979
    %v1324 = vunpack.c.h.b16 %v979
    %v1325 = vunpack.c.l.b16 %v980
    %v1326 = vunpack.c.h.b16 %v980
    %v1327 = vunpack.c.l.b16 %v981
    %v1328 = vunpack.c.h.b16 %v981
    %v1329 = vunpack.c.l.b16 %v982
    %v1330 = vunpack.c.h.b16 %v982
    %v1331 = vunpack.c.l.b16 %v983
    %v1332 = vunpack.c.h.b16 %v983
    %v1333 = vunpack.c.l.b16 %v984
    %v1334 = vunpack.c.h.b16 %v984
    %v1335 = vunpack.c.l.b16 %v985
    %v1336 = vunpack.c.h.b16 %v985
    %v1337 = vunpack.c.l.b16 %v986
    %v1338 = vunpack.c.h.b16 %v986
    %v1339 = vunpack.c.l.b16 %v987
    %v1340 = vunpack.c.h.b16 %v987
    %v1341 = vunpack.c.l.b16 %v988
    %v1342 = vunpack.c.h.b16 %v988
    %v1343 = vunpack.c.l.b16 %v989
    %v1344 = vunpack.c.h.b16 %v989
    %v1345 = vunpack.c.l.b16 %v990
    %v1346 = vunpack.c.h.b16 %v990
    %v1347 = vunpack.c.l.b16 %v991
    %v1348 = vunpack.c.h.b16 %v991
    %v1349 = vunpack.c.l.b16 %v992
    %v1350 = vunpack.c.h.b16 %v992
    %v1351 = vunpack.c.l.b16 %v993
    %v1352 = vunpack.c.h.b16 %v993
    %v1353 = vunpack.c.l.b16 %v994
    %v1354 = vunpack.c.h.b16 %v994
    %v1355 = vunpack.c.l.b16 %v995
    %v1356 = vunpack.c.h.b16 %v995
    %v1357 = vunpack.c.l.b16 %v996
    %v1358 = vunpack.c.h.b16 %v996
    %v1359 = vunpack.c.l.b16 %v997
    %v1360 = vunpack.c.h.b16 %v997
    %v1361 = vunpack.c.l.b16 %v998
    %v1362 = vunpack.c.h.b16 %v998
    %v1363 = vunpack.c.l.b16 %v999
    %v1364 = vunpack.c.h.b16 %v999
    %v1365 = vunpack.c.l.b16 %v1000
    %v1366 = vunpack.c.h.b16 %v1000
    %v1367 = vunpack.c.l.b16 %v1001
    %v1368 = vunpack.c.h.b16 %v1001
    %v1369 = vunpack.c.l.b16 %v1002
    %v1370 = vunpack.c.h.b16 %v1002
    %v1371 = vunpack.c.l.b16 %v1003
    %v1372 = vunpack.c.h.b16 %v1003
    %v1373 = vunpack.c.l.b16 %v1004
    %v1374 = vunpack.c.h.b16 %v1004
    %v1375 = vunpack.c.l.b16 %v1005
    %v1376 = vunpack.c.h.b16 %v1005
    %v1377 = vunpack.c.l.b16 %v1006
    %v1378 = vunpack.c.h.b16 %v1006
    %v1379 = vunpack.c.l.b16 %v1007
    %v1380 = vunpack.c.h.b16 %v1007
    %v1381 = vunpack.c.l.b16 %v1008
    %v1382 = vunpack.c.h.b16 %v1008
    %v1383 = vunpack.c.l.b16 %v1009
    %v1384 = vunpack.c.h.b16 %v1009
    %v1385 = vunpack.c.l.b16 %v1010
    %v1386 = vunpack.c.h.b16 %v1010
    %v1387 = vunpack.c.l.b16 %v1011
    %v1388 = vunpack.c.h.b16 %v1011
    %v1389 = vunpack.c.l.b16 %v1012
    %v1390 = vunpack.c.h.b16 %v1012
    %v1391 = vunpack.c.l.b16 %v1013
    %v1392 = vunpack.c.h.b16 %v1013
    %v1393 = vunpack.c.l.b16 %v1014
    %v1394 = vunpack.c.h.b16 %v1014
    %v1395 = vunpack.c.l.b16 %v1015
    %v1396 = vunpack.c.h.b16 %v1015
    %v1397 = vunpack.c.l.b16 %v1016
    %v1398 = vunpack.c.h.b16 %v1016
    %v1399 = vunpack.c.l.b16 %v1017
    %v1400 = vunpack.c.h.b16 %v1017
    %v1401 = vunpack.c.l.b16 %v1018
    %v1402 = vunpack.c.h.b16 %v1018
    %v1403 = vunpack.c.l.b16 %v1019
    %v1404 = vunpack.c.h.b16 %v1019
    %v1405 = vunpack.c.l.b16 %v1020
    %v1406 = vunpack.c.h.b16 %v1020
    %v1407 = vunpack.c.l.b16 %v1021
    %v1408 = vunpack.c.h.b16 %v1021
    %v1409 = vunpack.c.l.b16 %v1022
    %v1410 = vunpack.c.h.b16 %v1022
    %v1411 = vunpack.c.l.b16 %v1023
    %v1412 = vunpack.c.h.b16 %v1023
    %v1413 = vunpack.c.l.b16 %v1024
    %v1414 = vunpack.c.h.b16 %v1024
    %v1415 = vunpack.c.l.b16 %v1025
    %v1416 = vunpack.c.h.b16 %v1025
    %v1417 = vunpack.c.l.b16 %v1026
    %v1418 = vunpack.c.h.b16 %v1026
    %v1419 = vunpack.c.l.b16 %v1027
    %v1420 = vunpack.c.h.b16 %v1027
    %v1421 = vunpack.c.l.b16 %v1028
    %v1422 = vunpack.c.h.b16 %v1028
    %v1423 = vunpack.c.l.b16 %v1029
    %v1424 = vunpack.c.h.b16 %v1029
    %v1425 = vunpack.c.l.b16 %v1030
    %v1426 = vunpack.c.h.b16 %v1030
    %v1427 = vpack.c.b16 %v1173, %v1171
    %v1428 = vpack.c.b16 %v1174, %v1172
    %v1429 = vpack.c.b16 %v1177, %v1175
    %v1430 = vpack.c.b16 %v1178, %v1176
    %v1431 = vpack.c.b16 %v1181, %v1179
    %v1432 = vpack.c.b16 %v1182, %v1180
    %v1433 = vpack.c.b16 %v1185, %v1183
    %v1434 = vpack.c.b16 %v1186, %v1184
    %v1435 = vpack.c.b16 %v1189, %v1187
    %v1436 = vpack.c.b16 %v1190, %v1188
    %v1437 = vpack.c.b16 %v1193, %v1191
    %v1438 = vpack.c.b16 %v1194, %v1192
    %v1439 = vpack.c.b16 %v1197, %v1195
    %v1440 = vpack.c.b16 %v1198, %v1196
    %v1441 = vpack.c.b16 %v1201, %v1199
    %v1442 = vpack.c.b16 %v1202, %v1200
    %v1443 = vpack.c.b16 %v1205, %v1203
    %v1444 = vpack.c.b16 %v1206, %v1204
    %v1445 = vpack.c.b16 %v1209, %v1207
    %v1446 = vpack.c.b16 %v1210, %v1208
    %v1447 = vpack.c.b16 %v1213, %v1211
    %v1448 = vpack.c.b16 %v1214, %v1212
    %v1449 = vpack.c.b16 %v1217, %v1215
    %v1450 = vpack.c.b16 %v1218, %v1216
    %v1451 = vpack.c.b16 %v1221, %v1219
    %v1452 = vpack.c.b16 %v1222, %v1220
    %v1453 = vpack.c.b16 %v1225, %v1223
    %v1454 = vpack.c.b16 %v1226, %v1224
    %v1455 = vpack.c.b16 %v1229, %v1227
    %v1456 = vpack.c.b16 %v1230, %v1228
    %v1457 = vpack.c.b16 %v1233, %v1231
    %v1458 = vpack.c.b16 %v1234, %v1232
    %v1459 = vpack.c.b16 %v1237, %v1235
    %v1460 = vpack.c.b16 %v1238, %v1236
    %v1461 = vpack.c.b16 %v1241, %v1239
    %v1462 = vpack.c.b16 %v1242, %v1240
    %v1463 = vpack.c.b16 %v1245, %v1243
    %v1464 = vpack.c.b16 %v1246, %v1244
    %v1465 = vpack.c.b16 %v1249, %v1247
    %v1466 = vpack.c.b16 %v1250, %v1248
    %v1467 = vpack.c.b16 %v1253, %v1251
    %v1468 = vpack.c.b16 %v1254, %v1252
    %v1469 = vpack.c.b16 %v1257, %v1255
    %v1470 = vpack.c.b16 %v1258, %v1256
    %v1471 = vpack.c.b16 %v1261, %v1259
    %v1472 = vpack.c.b16 %v1262, %v1260
    %v1473 = vpack.c.b16 %v1265, %v1263
    %v1474 = vpack.c.b16 %v1266, %v1264
    %v1475 = vpack.c.b16 %v1269, %v1267
    %v1476 = vpack.c.b16 %v1270, %v1268
    %v1477 = vpack.c.b16 %v1273, %v1271
    %v1478 = vpack.c.b16 %v1274, %v1272
    %v1479 = vpack.c.b16 %v1277, %v1275
    %v1480 = vpack.c.b16 %v1278, %v1276
    %v1481 = vpack.c.b16 %v1281, %v1279
    %v1482 = vpack.c.b16 %v1282, %v1280
    %v1483 = vpack.c.b16 %v1285, %v1283
    %v1484 = vpack.c.b16 %v1286, %v1284
    %v1485 = vpack.c.b16 %v1289, %v1287
    %v1486 = vpack.c.b16 %v1290, %v1288
    %v1487 = vpack.c.b16 %v1293, %v1291
    %v1488 = vpack.c.b16 %v1294, %v1292
    %v1489 = vpack.c.b16 %v1297, %v1295
    %v1490 = vpack.c.b16 %v1298, %v1296
    %v1491 = vpack.c.b16 %v1301, %v1299
    %v1492 = vpack.c.b16 %v1302, %v1300
    %v1493 = vpack.c.b16 %v1305, %v1303
    %v1494 = vpack.c.b16 %v1306, %v1304
    %v1495 = vpack.c.b16 %v1309, %v1307
    %v1496 = vpack.c.b16 %v1310, %v1308
    %v1497 = vpack.c.b16 %v1313, %v1311
    %v1498 = vpack.c.b16 %v1314, %v1312
    %v1499 = vpack.c.b16 %v1317, %v1315
    %v1500 = vpack.c.b16 %v1318, %v1316
    %v1501 = vpack.c.b16 %v1321, %v1319
    %v1502 = vpack.c.b16 %v1322, %v1320
    %v1503 = vpack.c.b16 %v1325, %v1323
    %v1504 = vpack.c.b16 %v1326, %v1324
    %v1505 = vpack.c.b16 %v1329, %v1327
    %v1506 = vpack.c.b16 %v1330, %v1328
    %v1507 = vpack.c.b16 %v1333, %v1331
    %v1508 = vpack.c.b16 %v1334, %v1332
    %v1509 = vpack.c.b16 %v1337, %v1335
    %v1510 = vpack.c.b16 %v1338, %v1336
    %v1511 = vpack.c.b16 %v1341, %v1339
    %v1512 = vpack.c.b16 %v1342, %v1340
    %v1513 = vpack.c.b16 %v1345, %v1343
    %v1514 = vpack.c.b16 %v1346, %v1344
    %v1515 = vpack.c.b16 %v1349, %v1347
    %v1516 = vpack.c.b16 %v1350, %v1348
    %v1517 = vpack.c.b16 %v1353, %v1351
    %v1518 = vpack.c.b16 %v1354, %v1352
    %v1519 = vpack.c.b16 %v1357, %v1355
    %v1520 = vpack.c.b16 %v1358, %v1356
    %v1521 = vpack.c.b16 %v1361, %v1359
    %v1522 = vpack.c.b16 %v1362, %v1360
    %v1523 = vpack.c.b16 %v1365, %v1363
    %v1524 = vpack.c.b16 %v1366, %v1364
    %v1525 = vpack.c.b16 %v1369, %v1367
    %v1526 = vpack.c.b16 %v1370, %v1368
    %v1527 = vpack.c.b16 %v1373, %v1371
    %v1528 = vpack.c.b16 %v1374, %v1372
    %v1529 = vpack.c.b16 %v1377, %v1375
    %v1530 = vpack.c.b16 %v1378, %v1376
    %v1531 = vpack.c.b16 %v1381, %v1379
    %v1532 = vpack.c.b16 %v1382, %v1380
    %v1533 = vpack.c.b16 %v1385, %v1383
    %v1534 = vpack.c.b16 %v1386, %v1384
    %v1535 = vpack.c.b16 %v1389, %v1387
    %v1536 = vpack.c.b16 %v1390, %v1388
    %v1537 = vpack.c.b16 %v1393, %v1391
    %v1538 = vpack.c.b16 %v1394, %v1392
    %v1539 = vpack.c.b16 %v1397, %v1395
    %v1540 = vpack.c.b16 %v1398, %v1396
    %v1541 = vpack.c.b16 %v1401, %v1399
    %v1542 = vpack.c.b16 %v1402, %v1400
    %v1543 = vpack.c.b16 %v1405, %v1403
    %v1544 = vpack.c.b16 %v1406, %v1404
    %v1545 = vpack.c.b16 %v1409, %v1407
    %v1546 = vpack.c.b16 %v1410, %v1408
    %v1547 = vpack.c.b16 %v1413, %v1411
    %v1548 = vpack.c.b16 %v1414, %v1412
    %v1549 = vpack.c.b16 %v1417, %v1415
    %v1550 = vpack.c.b16 %v1418, %v1416
    %v1551 = vpack.c.b16 %v1421, %v1419
    %v1552 = vpack.c.b16 %v1422, %v1420
    %v1553 = vpack.c.b16 %v1425, %v1423
    %v1554 = vpack.c.b16 %v1426, %v1424
    %1683 = vmatprep.subr.bf16.mxu0 %v1428
    %1684 = vmatpush1.bf16.msra.mxu0 %v1427
    %1685 = vmatprep.subr.bf16.mxu0 %v1430
    %1686 = vmatpush1.bf16.msra.mxu0 %v1429
    %1687 = vmatprep.subr.bf16.mxu0 %v1432
    %1688 = vmatpush1.bf16.msra.mxu0 %v1431
    %1689 = vmatprep.subr.bf16.mxu0 %v1434
    %1690 = vmatpush1.bf16.msra.mxu0 %v1433
    %1691 = vmatprep.subr.bf16.mxu0 %v1436
    %1692 = vmatpush1.bf16.msra.mxu0 %v1435
    %1693 = vmatprep.subr.bf16.mxu0 %v1438
    %1694 = vmatpush1.bf16.msra.mxu0 %v1437
    %1695 = vmatprep.subr.bf16.mxu0 %v1440
    %1696 = vmatpush1.bf16.msra.mxu0 %v1439
    %1697 = vmatprep.subr.bf16.mxu0 %v1442
    %1698 = vmatpush1.bf16.msra.mxu0 %v1441
    %1699 = vmatprep.subr.bf16.mxu0 %v1444
    %1700 = vmatpush1.bf16.msra.mxu0 %v1443
    %1701 = vmatprep.subr.bf16.mxu0 %v1446
    %1702 = vmatpush1.bf16.msra.mxu0 %v1445
    %1703 = vmatprep.subr.bf16.mxu0 %v1448
    %1704 = vmatpush1.bf16.msra.mxu0 %v1447
    %1705 = vmatprep.subr.bf16.mxu0 %v1450
    %1706 = vmatpush1.bf16.msra.mxu0 %v1449
    %1707 = vmatprep.subr.bf16.mxu0 %v1452
    %1708 = vmatpush1.bf16.msra.mxu0 %v1451
    %1709 = vmatprep.subr.bf16.mxu0 %v1454
    %1710 = vmatpush1.bf16.msra.mxu0 %v1453
    %1711 = vmatprep.subr.bf16.mxu0 %v1456
    %1712 = vmatpush1.bf16.msra.mxu0 %v1455
    %1713 = vmatprep.subr.bf16.mxu0 %v1458
    %1714 = vmatpush1.bf16.msra.mxu0 %v1457
    %1715 = vmatprep.mubr.bf16.mxu0 %v896
    %1716 = vmatmul.mubr.bf16.gmra.mrb[0].mxu0 %v895
    %v1717 = vpop.f32.mrb[0].mxu0
    %v1718 = vadd.f32 %v1036, %v1717
    %v1719 = vpop.f32.mrb[0].mxu0
    %v1720 = vadd.f32 %v1040, %v1719
    %v1721 = vpop.f32.mrb[0].mxu0
    %v1722 = vpop.f32.mrb[0].mxu0
    %1723 = vdwg.mxu0
    %1724 = vmatprep.subr.bf16.mxu0 %v1460
    %1725 = vmatpush1.bf16.msra.mxu0 %v1459
    %1726 = vmatprep.subr.bf16.mxu0 %v1462
    %1727 = vmatpush1.bf16.msra.mxu0 %v1461
    %1728 = vmatprep.subr.bf16.mxu0 %v1464
    %1729 = vmatpush1.bf16.msra.mxu0 %v1463
    %1730 = vmatprep.subr.bf16.mxu0 %v1466
    %1731 = vmatpush1.bf16.msra.mxu0 %v1465
    %1732 = vmatprep.subr.bf16.mxu0 %v1468
    %1733 = vmatpush1.bf16.msra.mxu0 %v1467
    %1734 = vmatprep.subr.bf16.mxu0 %v1470
    %1735 = vmatpush1.bf16.msra.mxu0 %v1469
    %1736 = vmatprep.subr.bf16.mxu0 %v1472
    %1737 = vmatpush1.bf16.msra.mxu0 %v1471
    %1738 = vmatprep.subr.bf16.mxu0 %v1474
    %1739 = vmatpush1.bf16.msra.mxu0 %v1473
    %1740 = vmatprep.subr.bf16.mxu0 %v1476
    %1741 = vmatpush1.bf16.msra.mxu0 %v1475
    %1742 = vmatprep.subr.bf16.mxu0 %v1478
    %1743 = vmatpush1.bf16.msra.mxu0 %v1477
    %1744 = vmatprep.subr.bf16.mxu0 %v1480
    %1745 = vmatpush1.bf16.msra.mxu0 %v1479
    %1746 = vmatprep.subr.bf16.mxu0 %v1482
    %1747 = vmatpush1.bf16.msra.mxu0 %v1481
    %1748 = vmatprep.subr.bf16.mxu0 %v1484
    %1749 = vmatpush1.bf16.msra.mxu0 %v1483
    %1750 = vmatprep.subr.bf16.mxu0 %v1486
    %1751 = vmatpush1.bf16.msra.mxu0 %v1485
    %1752 = vmatprep.subr.bf16.mxu0 %v1488
    %1753 = vmatpush1.bf16.msra.mxu0 %v1487
    %1754 = vmatprep.subr.bf16.mxu0 %v1490
    %1755 = vmatpush1.bf16.msra.mxu0 %v1489
    %1756 = vmatprep.mubr.bf16.mxu0 %v898
    %1757 = vmatmul.mubr.bf16.gmra.mrb[0].mxu0 %v897
    %v1758 = vpop.f32.mrb[0].mxu0
    %v1759 = vadd.f32 %v1718, %v1758
    %v1760 = vpop.f32.mrb[0].mxu0
    %v1761 = vadd.f32 %v1720, %v1760
    %v1762 = vpop.f32.mrb[0].mxu0
    %v1763 = vpop.f32.mrb[0].mxu0
    %1764 = vdwg.mxu0
    %1765 = vmatprep.subr.bf16.mxu0 %v1492
    %1766 = vmatpush1.bf16.msra.mxu0 %v1491
    %1767 = vmatprep.subr.bf16.mxu0 %v1494
    %1768 = vmatpush1.bf16.msra.mxu0 %v1493
    %1769 = vmatprep.subr.bf16.mxu0 %v1496
    %1770 = vmatpush1.bf16.msra.mxu0 %v1495
    %1771 = vmatprep.subr.bf16.mxu0 %v1498
    %1772 = vmatpush1.bf16.msra.mxu0 %v1497
    %1773 = vmatprep.subr.bf16.mxu0 %v1500
    %1774 = vmatpush1.bf16.msra.mxu0 %v1499
    %1775 = vmatprep.subr.bf16.mxu0 %v1502
    %1776 = vmatpush1.bf16.msra.mxu0 %v1501
    %1777 = vmatprep.subr.bf16.mxu0 %v1504
    %1778 = vmatpush1.bf16.msra.mxu0 %v1503
    %1779 = vmatprep.subr.bf16.mxu0 %v1506
    %1780 = vmatpush1.bf16.msra.mxu0 %v1505
    %1781 = vmatprep.subr.bf16.mxu0 %v1508
    %1782 = vmatpush1.bf16.msra.mxu0 %v1507
    %1783 = vmatprep.subr.bf16.mxu0 %v1510
    %1784 = vmatpush1.bf16.msra.mxu0 %v1509
    %1785 = vmatprep.subr.bf16.mxu0 %v1512
    %1786 = vmatpush1.bf16.msra.mxu0 %v1511
    %1787 = vmatprep.subr.bf16.mxu0 %v1514
    %1788 = vmatpush1.bf16.msra.mxu0 %v1513
    %1789 = vmatprep.subr.bf16.mxu0 %v1516
    %1790 = vmatpush1.bf16.msra.mxu0 %v1515
    %1791 = vmatprep.subr.bf16.mxu0 %v1518
    %1792 = vmatpush1.bf16.msra.mxu0 %v1517
    %1793 = vmatprep.subr.bf16.mxu0 %v1520
    %1794 = vmatpush1.bf16.msra.mxu0 %v1519
    %1795 = vmatprep.subr.bf16.mxu0 %v1522
    %1796 = vmatpush1.bf16.msra.mxu0 %v1521
    %1797 = vmatprep.mubr.bf16.mxu0 %v900
    %1798 = vmatmul.mubr.bf16.gmra.mrb[0].mxu0 %v899
    %v1799 = vpop.f32.mrb[0].mxu0
    %v1800 = vadd.f32 %v1759, %v1799
    %v1801 = vpop.f32.mrb[0].mxu0
    %v1802 = vadd.f32 %v1761, %v1801
    %v1803 = vpop.f32.mrb[0].mxu0
    %v1804 = vpop.f32.mrb[0].mxu0
    %1805 = vdwg.mxu0
    %1806 = vmatprep.subr.bf16.mxu0 %v1524
    %1807 = vmatpush1.bf16.msra.mxu0 %v1523
    %1808 = vmatprep.subr.bf16.mxu0 %v1526
    %1809 = vmatpush1.bf16.msra.mxu0 %v1525
    %1810 = vmatprep.subr.bf16.mxu0 %v1528
    %1811 = vmatpush1.bf16.msra.mxu0 %v1527
    %1812 = vmatprep.subr.bf16.mxu0 %v1530
    %1813 = vmatpush1.bf16.msra.mxu0 %v1529
    %1814 = vmatprep.subr.bf16.mxu0 %v1532
    %1815 = vmatpush1.bf16.msra.mxu0 %v1531
    %1816 = vmatprep.subr.bf16.mxu0 %v1534
    %1817 = vmatpush1.bf16.msra.mxu0 %v1533
    %1818 = vmatprep.subr.bf16.mxu0 %v1536
    %1819 = vmatpush1.bf16.msra.mxu0 %v1535
    %1820 = vmatprep.subr.bf16.mxu0 %v1538
    %1821 = vmatpush1.bf16.msra.mxu0 %v1537
    %1822 = vmatprep.subr.bf16.mxu0 %v1540
    %1823 = vmatpush1.bf16.msra.mxu0 %v1539
    %1824 = vmatprep.subr.bf16.mxu0 %v1542
    %1825 = vmatpush1.bf16.msra.mxu0 %v1541
    %1826 = vmatprep.subr.bf16.mxu0 %v1544
    %1827 = vmatpush1.bf16.msra.mxu0 %v1543
    %1828 = vmatprep.subr.bf16.mxu0 %v1546
    %1829 = vmatpush1.bf16.msra.mxu0 %v1545
    %1830 = vmatprep.subr.bf16.mxu0 %v1548
    %1831 = vmatpush1.bf16.msra.mxu0 %v1547
    %1832 = vmatprep.subr.bf16.mxu0 %v1550
    %1833 = vmatpush1.bf16.msra.mxu0 %v1549
    %1834 = vmatprep.subr.bf16.mxu0 %v1552
    %1835 = vmatpush1.bf16.msra.mxu0 %v1551
    %1836 = vmatprep.subr.bf16.mxu0 %v1554
    %1837 = vmatpush1.bf16.msra.mxu0 %v1553
    %1838 = vmatprep.mubr.bf16.mxu0 %v902
    %1839 = vmatmul.mubr.bf16.gmra.mrb[0].mxu0 %v901
    %v1840 = vpop.f32.mrb[0].mxu0
    %v1841 = vadd.f32 %v1800, %v1840
    %v1842 = vpop.f32.mrb[0].mxu0
    %v1843 = vadd.f32 %v1802, %v1842
    %v1844 = vpop.f32.mrb[0].mxu0
    %v1845 = vpop.f32.mrb[0].mxu0
    %1846 = vdwg.mxu0
    %v1847 = vmax.f32 %v1841, 0.0
    %v1848 = vmax.f32 %v1843, 0.0
    %1849 = vst [vmem:[#allocation12] sm:$0xff] %v1847
    %1850 = vst [vmem:[#allocation12 + $0x8] sm:$0xff] %v1848
    %v1851 = vld [vmem:[%s6] sm:$0x3]
    %v1853 = vlaneseq
    %v1854 = vshrl.u32 %v1853, 7
    %v1855 = vsub.s32 0, %v1854
    %v1856 = vrot.slane %v1851, %v1855
    %v1857 = vlaneseq
    %v1858 = vshrl.u32 %v1857, 7
    %v1859 = vsub.s32 1, %v1858
    %v1860 = vrot.slane %v1851, %v1859
    %v1863 = vmul.f32 %v1847, %v1856
    %v1864 = vmul.f32 %v1848, %v1860
    %v1865 = vadd.f32 %v1863, %v1864
    %1866 = vadd.xlane.f32.xlu0 %v1865
    %v1867 = vpop.xlane.xlu0 %1866
    %s1868 = sld [smem:[#allocation2]]
    %v1869 = vstv %s1868
    %v1870 = vadd.f32 %v1867, %v1869
    %vm1871 = vcmask 7168
    %1872 = vst.msk [vmem:[%s8] sm:$0xff] %vm1871, %v1870
    // Predicated region
    $region50: #{dta_mlp.1} parent=1 // pred_check
      _
    $region51: #{dta_mlp.1} parent=1 // pred_check_branch
      %1874 = sbr.rel (0) target = $region53
    $region52: #{dta_mlp.1} parent=1 // pred_region
      _
    $region53: #{dta_mlp.1} parent=1 // pred_fallthru
      _
    // Predicated region
    $region54: #{dta_mlp.1} parent=1 // pred_check
      _
    $region55: #{dta_mlp.1} parent=1 // pred_check_branch
      %1876 = sbr.rel (0) target = $region57
    $region56: #{dta_mlp.1} parent=1 // pred_region
      %s1878 = ssub.s32 256, 256
      %1879 = vsyncadd [#allocation5], %s1878
      %s1881 = sshll.u32 [#allocation11], 4
      %s1882 = int_to_ptr.vmem [resolvable:$true] %s1881
      %1884 = dma.vmem_to_hbm [thread:$0]  %s1882, 256, %s9, [#allocation5]
    $region57: #{dta_mlp.1} parent=1 // pred_fallthru
      _
    // Predicated region
    $region58: #{dta_mlp.1} parent=1 // pred_check
      _
    $region59: #{dta_mlp.1} parent=1 // pred_check_branch
      %1886 = sbr.rel (0) target = $region61
    $region60: #{dta_mlp.1} parent=1 // pred_region
      %s1888 = ssub.s32 256, 256
      %1889 = vsyncadd [#allocation13], %s1888
      %s1891 = sshll.u32 [#allocation12], 4
      %s1892 = int_to_ptr.vmem [resolvable:$true] %s1891
      %1894 = dma.vmem_to_hbm [thread:$0]  %s1892, 256, %s10, [#allocation13]
    $region61: #{dta_mlp.1} parent=1 // pred_fallthru
      _
    // Predicated region
    $region62: #{dta_mlp.1} parent=1 // pred_check
      _
    $region63: #{dta_mlp.1} parent=1 // pred_check_branch
      %1896 = sbr.rel (0) target = $region65
    $region64: #{dta_mlp.1} parent=1 // pred_region
      _
    $region65: #{dta_mlp.1} parent=1 // pred_fallthru
      _
    // Predicated region
    $region66: #{dta_mlp.1} parent=1 // pred_check
      _
    $region67: #{dta_mlp.1} parent=1 // pred_check_branch
      %1898 = sbr.rel (0) target = $region69
    $region68: #{dta_mlp.1} parent=1 // pred_region
      %1899 = dma.done [#allocation5], 256
    $region69: #{dta_mlp.1} parent=1 // pred_fallthru
      _
    // Predicated region
    $region70: #{dta_mlp.1} parent=1 // pred_check
      _
    $region71: #{dta_mlp.1} parent=1 // pred_check_branch
      %1901 = sbr.rel (0) target = $region73
    $region72: #{dta_mlp.1} parent=1 // pred_region
      %1902 = dma.done [#allocation13], 256
    $region73: #{dta_mlp.1} parent=1 // pred_fallthru
      _
    %1903 = vsyncpa [#allocation4], 1
    %1904 = vsyncpa [#allocation7], 1
    %1905 = vsyncpa [#allocation10], 1
    %1906 = vsyncpa [#allocation5], 1
    %1907 = vsyncpa [#allocation13], 1

</llo_original>
